<compile_context>
chip_gen: v7x
topology: tpu7x:2x2x1
jax: 0.10.0
libtpu: 0.0.40
codegen_flags: <defaults>
</compile_context>

<pallas_src>
import functools

import jax
import jax.numpy as jnp
from jax import lax
from jax.experimental import pallas as pl
from jax.experimental.pallas import tpu as pltpu

ALPHA = 2.0               # SparsemaxLoss hard-codes alpha = 2
_LANE = 128               # TPU vreg lane width
_MAX_USEFUL_ITERS = 30    # bisection interval < f32 resolution after ~30 halvings


def _sparsemax_loss_kernel(x_ref, tgt_ref, loss_ref, xs_ref, *,
                           n_iter, unroll, reuse_regs, batch_major_in):
    """One batch tile.

    x_ref   : (TB, C) native dtype if batch_major_in else (C, TB)
    tgt_ref : (1, TB) int32
    loss_ref: (1, TB) f32  (lane-dense store)
    xs_ref  : (C, TB) f32 VMEM scratch (class-major tile, upcast once)
    """
    if batch_major_in:
        C = x_ref.shape[1]
        # Transpose the batch-major block to class-major on the otherwise idle
        # MXU (identity matmul with NT dimension numbers, the same pattern as
        # flash-attention's q @ k^T).  HIGHEST precision makes the f32
        # pass-through exact, so the wrapper never pays an HBM transpose pass.
        eye = (lax.broadcasted_iota(jnp.int32, (C, C), 0)
               == lax.broadcasted_iota(jnp.int32, (C, C), 1)).astype(jnp.float32)
        Xc = lax.dot_general(eye, x_ref[...].astype(jnp.float32),
                             (((1,), (1,)), ((), ())),
                             precision=lax.Precision.HIGHEST,
                             preferred_element_type=jnp.float32)     # (C, TB)
    else:
        C = x_ref.shape[0]
        Xc = x_ref[...].astype(jnp.float32)                          # (C, TB)

    if not reuse_regs:
        xs_ref[...] = Xc      # hoisted upcast/transpose; the loop re-reads VMEM

    def load_x():
        # Small tiles: keep the f32 tile live in vregs across the whole loop.
        # Large tiles: re-read the f32 scratch each iteration (loads hide under
        # the EUP-bound work and keep vreg/spill pressure flat).
        return Xc if reuse_regs else xs_ref[...]

    # alpha == 2  =>  (alpha - 1) * X == X, so the bisection runs directly on X.
    m_val = jnp.max(Xc, axis=0, keepdims=True)             # (1, TB)
    t_min0 = m_val - 1.0
    t_max0 = m_val - float(C) ** (1.0 - ALPHA)             # d ** (1 - alpha)
    diff0 = t_max0 - t_min0

    # Reference quirk reproduced exactly: exponent is 1/(d-1), not 1/(alpha-1).
    expo = jnp.float32(1.0 / (C - 1))

    def _pow(base):
        # base >= 0 already (relu'd): log(0) = -inf, exp(-inf) = 0 -> no selects.
        # TODO(synk): bf16 log/exp here is a possible ~1.5-2x EUP win on
        # v6e/v7x, but bisection decisions near sum(Z)=1 can flip at bf16
        # precision and v5e has no bf16 EUP, so it is intentionally kept f32.
        return jnp.exp(expo * jnp.log(base))

    def body(_, carry):
        t_min, diff, _ = carry
        diff = diff * 0.5
        t = t_min + diff                                    # (1, TB)
        Z = _pow(jnp.maximum(load_x() - t, 0.0))            # (C, TB)
        ge = (jnp.sum(Z, axis=0, keepdims=True) - 1.0) >= 0.0
        t_min = jnp.where(ge, t, t_min)
        return (t_min, diff, t)

    # Carry only (1, TB) rows; Z is recomputed once from the final midpoint
    # t_last (the reference normalizes the *last* iterate's Z).  Unrolling lets
    # the scheduler overlap iteration i's reduce/select tail with iteration
    # i+1's EUP front and removes per-iteration loop overhead.
    _, _, t_last = lax.fori_loop(0, n_iter, body, (t_min0, diff0, t_min0),
                                 unroll=unroll)

    Xf = load_x()
    Z = _pow(jnp.maximum(Xf - t_last, 0.0))

    # Epilogue without materializing p = Z / sum(Z): only (1, TB) rows get
    # normalized (approx EUP reciprocal + one Newton refinement step).
    s = jnp.sum(Z, axis=0, keepdims=True)
    sum_z2 = jnp.sum(Z * Z, axis=0, keepdims=True)
    sum_zx = jnp.sum(Z * Xf, axis=0, keepdims=True)
    r = pl.reciprocal(s, approx=True)
    r = r * (2.0 - s * r)

    # loss = (1 - sum_j p_j^alpha) / (alpha*(alpha-1)), alpha = 2
    loss = (1.0 - sum_z2 * r * r) * (1.0 / (ALPHA * (ALPHA - 1.0)))

    # + sum_j (p_j - onehot(target)_j) X_j == sum_j p_j X_j - X[target]
    tgt = tgt_ref[...]                                      # (1, TB) int32
    cls = lax.broadcasted_iota(jnp.int32, Xf.shape, 0)
    x_at_tgt = jnp.sum(jnp.where(cls == tgt, Xf, 0.0), axis=0, keepdims=True)
    loss = loss + sum_zx * r - x_at_tgt

    # TODO(synk): ignore_index masking is dead code for the default -100 (< 0),
    # so it is intentionally not implemented in-kernel.
    loss_ref[...] = loss.astype(loss_ref.dtype)


def _round_up(x, m):
    return (x + m - 1) // m * m


def _choose_batch_tile(n, c, block_batch):
    """Batch-tile width: multiple of 128 lanes, VMEM- and megacore-aware."""
    n128 = _round_up(n, _LANE)
    # Keep the (C, TB) f32 scratch <= ~2 MiB; the double-buffered native-dtype
    # input block adds at most another ~4 MiB on top of that.
    cap = max(_LANE, ((2 * 1024 * 1024) // (c * 4)) // _LANE * _LANE)
    tb = min(_round_up(max(int(block_batch), _LANE), _LANE), n128, cap)
    # Aim for >= 4 grid steps when the batch allows it, so the "parallel" batch
    # axis keeps both v7x TensorCores busy with >= 2 steps each (no downside on
    # single-core v5e/v6e beyond deeper pipelining).
    if n128 >= 4 * _LANE:
        tb = min(tb, max(_LANE, (n128 // 4) // _LANE * _LANE))
    return tb


def sparsemax_loss(X, target, n_iter=50, block_batch=1024):
    """Forward pass of SparsemaxLoss (alpha = 2, bisection entmax loss)."""
    N, C = X.shape
    assert C > 1, "reference exponent 1/(C-1) requires at least two classes"

    # Iterations past ~30 halvings cannot move t at f32 resolution (the initial
    # bracket is <= 1 wide); capping removes ~40% of the EUP-bound work.  Last-
    # ulp differences vs. the 50-iteration reference are possible but << 1e-3.
    n_iter_eff = max(1, min(int(n_iter), _MAX_USEFUL_ITERS))

    itemsize = jnp.dtype(X.dtype).itemsize
    tb = _choose_batch_tile(N, C, block_batch)
    grid_steps = pl.cdiv(N, tb)

    tile_f32_bytes = C * tb * 4
    # f32 scratch + double-buffered native-dtype input tile must fit VMEM on
    # every generation (32 MiB scoped limit below; v7x physical is 64 MiB).
    vmem_est = tile_f32_bytes + 2 * C * tb * itemsize
    if vmem_est > 24 * 1024 * 1024:
        # TODO(synk): stream class chunks through a (1, TB) partial-sum scratch
        # for very large class counts instead of refusing.
        raise ValueError(
            f"num_classes={C} needs ~{vmem_est >> 20} MiB VMEM per tile; a "
            "class-tiled kernel variant is required for this size")

    reuse_regs = tile_f32_bytes <= 64 * 1024
    if tile_f32_bytes <= 32 * 1024:
        unroll = n_iter_eff                     # tiny tile: fully unroll
    elif tile_f32_bytes <= 128 * 1024:
        unroll = 4
    else:
        unroll = 2

    # Small class counts: ship batch-major (N, C) blocks straight from X and
    # transpose in-kernel on the idle MXU -> no extra HBM transpose/pad pass.
    # Large class counts: a (C, C) identity matmul would not be cheap, so fall
    # back to a wrapper transpose (still no pad copy; ragged edge is masked).
    batch_major_in = C <= 256
    if batch_major_in:
        x_in = X                                             # (N, C)
        x_spec = pl.BlockSpec((tb, C), lambda i: (i, 0))
    else:
        x_in = X.T                                           # (C, N)
        x_spec = pl.BlockSpec((C, tb), lambda i: (0, i))

    tgt2d = target.astype(jnp.int32).reshape(1, N)

    kernel = functools.partial(
        _sparsemax_loss_kernel, n_iter=n_iter_eff, unroll=unroll,
        reuse_regs=reuse_regs, batch_major_in=batch_major_in)

    loss2d = pl.pallas_call(
        kernel,
        out_shape=jax.ShapeDtypeStruct((1, N), jnp.float32),
        grid_spec=pltpu.PrefetchScalarGridSpec(
            num_scalar_prefetch=0,
            grid=(grid_steps,),
            in_specs=[
                x_spec,
                pl.BlockSpec((1, tb), lambda i: (0, i)),
            ],
            out_specs=pl.BlockSpec((1, tb), lambda i: (0, i)),
            scratch_shapes=[pltpu.VMEM((C, tb), jnp.float32)],
        ),
        compiler_params=pltpu.CompilerParams(
            dimension_semantics=("parallel",),
            vmem_limit_bytes=32 * 1024 * 1024,
        ),
    )(x_in, tgt2d)
    return loss2d.reshape(N)


def _reference_sparsemax_loss(X, target, n_iter=50):
    """Pure-JAX transliteration of the PyTorch forward (for sanity check)."""
    X = X.astype(jnp.float32)
    N, C = X.shape
    Xs = (ALPHA - 1.0) * X
    m_val = jnp.max(Xs, axis=-1, keepdims=True)
    t_min = m_val - 1.0
    t_max = m_val - float(C) ** (1.0 - ALPHA)
    diff = t_max - t_min
    expo = 1.0 / (C - 1)
    Z = jnp.zeros_like(Xs)
    for _ in range(n_iter):
        diff = diff / 2.0
        t = t_min + diff
        Z = jnp.maximum(Xs - t, 0.0) ** expo
        mask = (jnp.sum(Z, axis=-1, keepdims=True) - 1.0) >= 0.0
        t_min = jnp.where(mask, t, t_min)
    p = Z / jnp.sum(Z, axis=-1, keepdims=True)
    loss = (1.0 - jnp.sum(p ** ALPHA, axis=-1)) / (ALPHA * (ALPHA - 1.0))
    onehot = jax.nn.one_hot(target, C, dtype=jnp.float32)
    loss = loss + jnp.sum((p - onehot) * X, axis=-1)
    return loss


def _check(key, n, c, atol=2e-3, rtol=2e-3):
    kx, kt = jax.random.split(key)
    X = jax.random.normal(kx, (n, c), dtype=jnp.float32)
    t = jax.random.randint(kt, (n,), 0, c, dtype=jnp.int32)
    out = sparsemax_loss(X, t, n_iter=50)
    jax.block_until_ready(out)
    ref = _reference_sparsemax_loss(X, t, n_iter=50)
    assert out.shape == (n,)
    assert jnp.allclose(out, ref, atol=atol, rtol=rtol), (n, c, out, ref)
    return out


if __name__ == "__main__":
    # Small demo shapes consistent with the module: (batch, classes).
    _check(jax.random.PRNGKey(0), 16, 32)       # single tile, in-kernel transpose
    _check(jax.random.PRNGKey(1), 272, 32)      # ragged batch edge (masked store)
    _check(jax.random.PRNGKey(2), 640, 48)      # multi-step "parallel" grid
    _check(jax.random.PRNGKey(3), 160, 384)     # large-C path: wrapper transpose,
                                                # VMEM scratch reload, unroll=2
    print("KERNEL_OK")
</pallas_src>

<mosaic_0001>
module attributes {stable_mosaic.version = 11 : i64} {
  func.func @_sparsemax_loss_kernel(%arg0: i32, %arg1: memref<128x32xf32, #tpu.memory_space<vmem>>, %arg2: memref<1x128xi32, #tpu.memory_space<vmem>>, %arg3: memref<1x128xf32, #tpu.memory_space<vmem>>, %arg4: memref<32x128xf32, #tpu.memory_space<vmem>>) attributes {dimension_semantics = [#tpu.dimension_semantics<parallel>], iteration_bounds = array<i64: 1>, scalar_prefetch = 0 : i64, scratch_operands = 1 : i64, tpu.core_type = #tpu.core_type<tc>, window_params = [{transform_indices = @transform_0, window_bounds = array<i64: 128, 32>}, {transform_indices = @transform_1, window_bounds = array<i64: 1, 128>}, {transform_indices = @transform_2, window_bounds = array<i64: 1, 128>}]} {
    %0 = tpu.iota {dimensions = array<i32: 0>} : vector<32x32xi32>
    %1 = tpu.iota {dimensions = array<i32: 1>} : vector<32x32xi32>
    %2 = arith.cmpi eq, %0, %1 : vector<32x32xi32>
    %3 = arith.extui %2 : vector<32x32xi1> to vector<32x32xi32>
    %4 = arith.sitofp %3 : vector<32x32xi32> to vector<32x32xf32>
    %c0 = arith.constant 0 : index
    %c0_0 = arith.constant 0 : index
    %5 = vector.load %arg1[%c0, %c0_0] : memref<128x32xf32, #tpu.memory_space<vmem>>, vector<128x32xf32>
    %cst = arith.constant dense<0.000000e+00> : vector<32x128xf32>
    %6 = tpu.matmul %4, %5, %cst {dimension_numbers = #tpu.dot_dimension_numbers<[1], [1], [0], [0], [0, 0, 1, 0], [], []>, precision = #tpu.contract_precision<fp32>} : vector<32x32xf32>, vector<128x32xf32>, vector<32x128xf32> -> vector<32x128xf32>
    %cst_1 = arith.constant dense<0xFF800000> : vector<128xf32>
    %7 = vector.multi_reduction <maximumf>, %6, %cst_1 [0] : vector<32x128xf32> to vector<128xf32>
    %8 = vector.shape_cast %7 : vector<128xf32> to vector<1x128xf32>
    %cst_2 = arith.constant 1.000000e+00 : f32
    %9 = vector.broadcast %cst_2 : f32 to vector<1x128xf32>
    %10 = arith.subf %8, %9 : vector<1x128xf32>
    %cst_3 = arith.constant 3.125000e-02 : f32
    %11 = vector.broadcast %cst_3 : f32 to vector<1x128xf32>
    %12 = arith.subf %8, %11 : vector<1x128xf32>
    %13 = arith.subf %12, %10 : vector<1x128xf32>
    %cst_4 = arith.constant 0.0322580636 : f32
    %c0_i32 = arith.constant 0 : i32
    %cst_5 = arith.constant 5.000000e-01 : f32
    %14 = vector.broadcast %cst_5 : f32 to vector<1x128xf32>
    %15 = arith.mulf %13, %14 : vector<1x128xf32>
    %16 = arith.addf %10, %15 : vector<1x128xf32>
    %17 = vector.broadcast %16 : vector<1x128xf32> to vector<32x128xf32>
    %18 = arith.subf %6, %17 : vector<32x128xf32>
    %cst_6 = arith.constant 0.000000e+00 : f32
    %19 = vector.broadcast %cst_6 : f32 to vector<32x128xf32>
    %20 = arith.maximumf %18, %19 : vector<32x128xf32>
    %21 = math.log %20 : vector<32x128xf32>
    %22 = vector.broadcast %cst_4 : f32 to vector<32x128xf32>
    %23 = arith.mulf %22, %21 : vector<32x128xf32>
    %24 = math.exp %23 : vector<32x128xf32>
    %cst_7 = arith.constant dense<0.000000e+00> : vector<128xf32>
    %25 = vector.multi_reduction <add>, %24, %cst_7 [0] : vector<32x128xf32> to vector<128xf32>
    %26 = vector.shape_cast %25 : vector<128xf32> to vector<1x128xf32>
    %cst_8 = arith.constant 1.000000e+00 : f32
    %27 = vector.broadcast %cst_8 : f32 to vector<1x128xf32>
    %28 = arith.subf %26, %27 : vector<1x128xf32>
    %cst_9 = arith.constant 0.000000e+00 : f32
    %29 = vector.broadcast %cst_9 : f32 to vector<1x128xf32>
    %30 = arith.cmpf oge, %28, %29 : vector<1x128xf32>
    %31 = arith.select %30, %16, %10 : vector<1x128xi1>, vector<1x128xf32>
    %c1_i32 = arith.constant 1 : i32
    %cst_10 = arith.constant 5.000000e-01 : f32
    %32 = vector.broadcast %cst_10 : f32 to vector<1x128xf32>
    %33 = arith.mulf %15, %32 : vector<1x128xf32>
    %34 = arith.addf %31, %33 : vector<1x128xf32>
    %35 = vector.broadcast %34 : vector<1x128xf32> to vector<32x128xf32>
    %36 = arith.subf %6, %35 : vector<32x128xf32>
    %cst_11 = arith.constant 0.000000e+00 : f32
    %37 = vector.broadcast %cst_11 : f32 to vector<32x128xf32>
    %38 = arith.maximumf %36, %37 : vector<32x128xf32>
    %39 = math.log %38 : vector<32x128xf32>
    %40 = vector.broadcast %cst_4 : f32 to vector<32x128xf32>
    %41 = arith.mulf %40, %39 : vector<32x128xf32>
    %42 = math.exp %41 : vector<32x128xf32>
    %cst_12 = arith.constant dense<0.000000e+00> : vector<128xf32>
    %43 = vector.multi_reduction <add>, %42, %cst_12 [0] : vector<32x128xf32> to vector<128xf32>
    %44 = vector.shape_cast %43 : vector<128xf32> to vector<1x128xf32>
    %cst_13 = arith.constant 1.000000e+00 : f32
    %45 = vector.broadcast %cst_13 : f32 to vector<1x128xf32>
    %46 = arith.subf %44, %45 : vector<1x128xf32>
    %cst_14 = arith.constant 0.000000e+00 : f32
    %47 = vector.broadcast %cst_14 : f32 to vector<1x128xf32>
    %48 = arith.cmpf oge, %46, %47 : vector<1x128xf32>
    %49 = arith.select %48, %34, %31 : vector<1x128xi1>, vector<1x128xf32>
    %c2_i32 = arith.constant 2 : i32
    %cst_15 = arith.constant 5.000000e-01 : f32
    %50 = vector.broadcast %cst_15 : f32 to vector<1x128xf32>
    %51 = arith.mulf %33, %50 : vector<1x128xf32>
    %52 = arith.addf %49, %51 : vector<1x128xf32>
    %53 = vector.broadcast %52 : vector<1x128xf32> to vector<32x128xf32>
    %54 = arith.subf %6, %53 : vector<32x128xf32>
    %cst_16 = arith.constant 0.000000e+00 : f32
    %55 = vector.broadcast %cst_16 : f32 to vector<32x128xf32>
    %56 = arith.maximumf %54, %55 : vector<32x128xf32>
    %57 = math.log %56 : vector<32x128xf32>
    %58 = vector.broadcast %cst_4 : f32 to vector<32x128xf32>
    %59 = arith.mulf %58, %57 : vector<32x128xf32>
    %60 = math.exp %59 : vector<32x128xf32>
    %cst_17 = arith.constant dense<0.000000e+00> : vector<128xf32>
    %61 = vector.multi_reduction <add>, %60, %cst_17 [0] : vector<32x128xf32> to vector<128xf32>
    %62 = vector.shape_cast %61 : vector<128xf32> to vector<1x128xf32>
    %cst_18 = arith.constant 1.000000e+00 : f32
    %63 = vector.broadcast %cst_18 : f32 to vector<1x128xf32>
    %64 = arith.subf %62, %63 : vector<1x128xf32>
    %cst_19 = arith.constant 0.000000e+00 : f32
    %65 = vector.broadcast %cst_19 : f32 to vector<1x128xf32>
    %66 = arith.cmpf oge, %64, %65 : vector<1x128xf32>
    %67 = arith.select %66, %52, %49 : vector<1x128xi1>, vector<1x128xf32>
    %c3_i32 = arith.constant 3 : i32
    %cst_20 = arith.constant 5.000000e-01 : f32
    %68 = vector.broadcast %cst_20 : f32 to vector<1x128xf32>
    %69 = arith.mulf %51, %68 : vector<1x128xf32>
    %70 = arith.addf %67, %69 : vector<1x128xf32>
    %71 = vector.broadcast %70 : vector<1x128xf32> to vector<32x128xf32>
    %72 = arith.subf %6, %71 : vector<32x128xf32>
    %cst_21 = arith.constant 0.000000e+00 : f32
    %73 = vector.broadcast %cst_21 : f32 to vector<32x128xf32>
    %74 = arith.maximumf %72, %73 : vector<32x128xf32>
    %75 = math.log %74 : vector<32x128xf32>
    %76 = vector.broadcast %cst_4 : f32 to vector<32x128xf32>
    %77 = arith.mulf %76, %75 : vector<32x128xf32>
    %78 = math.exp %77 : vector<32x128xf32>
    %cst_22 = arith.constant dense<0.000000e+00> : vector<128xf32>
    %79 = vector.multi_reduction <add>, %78, %cst_22 [0] : vector<32x128xf32> to vector<128xf32>
    %80 = vector.shape_cast %79 : vector<128xf32> to vector<1x128xf32>
    %cst_23 = arith.constant 1.000000e+00 : f32
    %81 = vector.broadcast %cst_23 : f32 to vector<1x128xf32>
    %82 = arith.subf %80, %81 : vector<1x128xf32>
    %cst_24 = arith.constant 0.000000e+00 : f32
    %83 = vector.broadcast %cst_24 : f32 to vector<1x128xf32>
    %84 = arith.cmpf oge, %82, %83 : vector<1x128xf32>
    %85 = arith.select %84, %70, %67 : vector<1x128xi1>, vector<1x128xf32>
    %c4_i32 = arith.constant 4 : i32
    %cst_25 = arith.constant 5.000000e-01 : f32
    %86 = vector.broadcast %cst_25 : f32 to vector<1x128xf32>
    %87 = arith.mulf %69, %86 : vector<1x128xf32>
    %88 = arith.addf %85, %87 : vector<1x128xf32>
    %89 = vector.broadcast %88 : vector<1x128xf32> to vector<32x128xf32>
    %90 = arith.subf %6, %89 : vector<32x128xf32>
    %cst_26 = arith.constant 0.000000e+00 : f32
    %91 = vector.broadcast %cst_26 : f32 to vector<32x128xf32>
    %92 = arith.maximumf %90, %91 : vector<32x128xf32>
    %93 = math.log %92 : vector<32x128xf32>
    %94 = vector.broadcast %cst_4 : f32 to vector<32x128xf32>
    %95 = arith.mulf %94, %93 : vector<32x128xf32>
    %96 = math.exp %95 : vector<32x128xf32>
    %cst_27 = arith.constant dense<0.000000e+00> : vector<128xf32>
    %97 = vector.multi_reduction <add>, %96, %cst_27 [0] : vector<32x128xf32> to vector<128xf32>
    %98 = vector.shape_cast %97 : vector<128xf32> to vector<1x128xf32>
    %cst_28 = arith.constant 1.000000e+00 : f32
    %99 = vector.broadcast %cst_28 : f32 to vector<1x128xf32>
    %100 = arith.subf %98, %99 : vector<1x128xf32>
    %cst_29 = arith.constant 0.000000e+00 : f32
    %101 = vector.broadcast %cst_29 : f32 to vector<1x128xf32>
    %102 = arith.cmpf oge, %100, %101 : vector<1x128xf32>
    %103 = arith.select %102, %88, %85 : vector<1x128xi1>, vector<1x128xf32>
    %c5_i32 = arith.constant 5 : i32
    %cst_30 = arith.constant 5.000000e-01 : f32
    %104 = vector.broadcast %cst_30 : f32 to vector<1x128xf32>
    %105 = arith.mulf %87, %104 : vector<1x128xf32>
    %106 = arith.addf %103, %105 : vector<1x128xf32>
    %107 = vector.broadcast %106 : vector<1x128xf32> to vector<32x128xf32>
    %108 = arith.subf %6, %107 : vector<32x128xf32>
    %cst_31 = arith.constant 0.000000e+00 : f32
    %109 = vector.broadcast %cst_31 : f32 to vector<32x128xf32>
    %110 = arith.maximumf %108, %109 : vector<32x128xf32>
    %111 = math.log %110 : vector<32x128xf32>
    %112 = vector.broadcast %cst_4 : f32 to vector<32x128xf32>
    %113 = arith.mulf %112, %111 : vector<32x128xf32>
    %114 = math.exp %113 : vector<32x128xf32>
    %cst_32 = arith.constant dense<0.000000e+00> : vector<128xf32>
    %115 = vector.multi_reduction <add>, %114, %cst_32 [0] : vector<32x128xf32> to vector<128xf32>
    %116 = vector.shape_cast %115 : vector<128xf32> to vector<1x128xf32>
    %cst_33 = arith.constant 1.000000e+00 : f32
    %117 = vector.broadcast %cst_33 : f32 to vector<1x128xf32>
    %118 = arith.subf %116, %117 : vector<1x128xf32>
    %cst_34 = arith.constant 0.000000e+00 : f32
    %119 = vector.broadcast %cst_34 : f32 to vector<1x128xf32>
    %120 = arith.cmpf oge, %118, %119 : vector<1x128xf32>
    %121 = arith.select %120, %106, %103 : vector<1x128xi1>, vector<1x128xf32>
    %c6_i32 = arith.constant 6 : i32
    %cst_35 = arith.constant 5.000000e-01 : f32
    %122 = vector.broadcast %cst_35 : f32 to vector<1x128xf32>
    %123 = arith.mulf %105, %122 : vector<1x128xf32>
    %124 = arith.addf %121, %123 : vector<1x128xf32>
    %125 = vector.broadcast %124 : vector<1x128xf32> to vector<32x128xf32>
    %126 = arith.subf %6, %125 : vector<32x128xf32>
    %cst_36 = arith.constant 0.000000e+00 : f32
    %127 = vector.broadcast %cst_36 : f32 to vector<32x128xf32>
    %128 = arith.maximumf %126, %127 : vector<32x128xf32>
    %129 = math.log %128 : vector<32x128xf32>
    %130 = vector.broadcast %cst_4 : f32 to vector<32x128xf32>
    %131 = arith.mulf %130, %129 : vector<32x128xf32>
    %132 = math.exp %131 : vector<32x128xf32>
    %cst_37 = arith.constant dense<0.000000e+00> : vector<128xf32>
    %133 = vector.multi_reduction <add>, %132, %cst_37 [0] : vector<32x128xf32> to vector<128xf32>
    %134 = vector.shape_cast %133 : vector<128xf32> to vector<1x128xf32>
    %cst_38 = arith.constant 1.000000e+00 : f32
    %135 = vector.broadcast %cst_38 : f32 to vector<1x128xf32>
    %136 = arith.subf %134, %135 : vector<1x128xf32>
    %cst_39 = arith.constant 0.000000e+00 : f32
    %137 = vector.broadcast %cst_39 : f32 to vector<1x128xf32>
    %138 = arith.cmpf oge, %136, %137 : vector<1x128xf32>
    %139 = arith.select %138, %124, %121 : vector<1x128xi1>, vector<1x128xf32>
    %c7_i32 = arith.constant 7 : i32
    %cst_40 = arith.constant 5.000000e-01 : f32
    %140 = vector.broadcast %cst_40 : f32 to vector<1x128xf32>
    %141 = arith.mulf %123, %140 : vector<1x128xf32>
    %142 = arith.addf %139, %141 : vector<1x128xf32>
    %143 = vector.broadcast %142 : vector<1x128xf32> to vector<32x128xf32>
    %144 = arith.subf %6, %143 : vector<32x128xf32>
    %cst_41 = arith.constant 0.000000e+00 : f32
    %145 = vector.broadcast %cst_41 : f32 to vector<32x128xf32>
    %146 = arith.maximumf %144, %145 : vector<32x128xf32>
    %147 = math.log %146 : vector<32x128xf32>
    %148 = vector.broadcast %cst_4 : f32 to vector<32x128xf32>
    %149 = arith.mulf %148, %147 : vector<32x128xf32>
    %150 = math.exp %149 : vector<32x128xf32>
    %cst_42 = arith.constant dense<0.000000e+00> : vector<128xf32>
    %151 = vector.multi_reduction <add>, %150, %cst_42 [0] : vector<32x128xf32> to vector<128xf32>
    %152 = vector.shape_cast %151 : vector<128xf32> to vector<1x128xf32>
    %cst_43 = arith.constant 1.000000e+00 : f32
    %153 = vector.broadcast %cst_43 : f32 to vector<1x128xf32>
    %154 = arith.subf %152, %153 : vector<1x128xf32>
    %cst_44 = arith.constant 0.000000e+00 : f32
    %155 = vector.broadcast %cst_44 : f32 to vector<1x128xf32>
    %156 = arith.cmpf oge, %154, %155 : vector<1x128xf32>
    %157 = arith.select %156, %142, %139 : vector<1x128xi1>, vector<1x128xf32>
    %c8_i32 = arith.constant 8 : i32
    %cst_45 = arith.constant 5.000000e-01 : f32
    %158 = vector.broadcast %cst_45 : f32 to vector<1x128xf32>
    %159 = arith.mulf %141, %158 : vector<1x128xf32>
    %160 = arith.addf %157, %159 : vector<1x128xf32>
    %161 = vector.broadcast %160 : vector<1x128xf32> to vector<32x128xf32>
    %162 = arith.subf %6, %161 : vector<32x128xf32>
    %cst_46 = arith.constant 0.000000e+00 : f32
    %163 = vector.broadcast %cst_46 : f32 to vector<32x128xf32>
    %164 = arith.maximumf %162, %163 : vector<32x128xf32>
    %165 = math.log %164 : vector<32x128xf32>
    %166 = vector.broadcast %cst_4 : f32 to vector<32x128xf32>
    %167 = arith.mulf %166, %165 : vector<32x128xf32>
    %168 = math.exp %167 : vector<32x128xf32>
    %cst_47 = arith.constant dense<0.000000e+00> : vector<128xf32>
    %169 = vector.multi_reduction <add>, %168, %cst_47 [0] : vector<32x128xf32> to vector<128xf32>
    %170 = vector.shape_cast %169 : vector<128xf32> to vector<1x128xf32>
    %cst_48 = arith.constant 1.000000e+00 : f32
    %171 = vector.broadcast %cst_48 : f32 to vector<1x128xf32>
    %172 = arith.subf %170, %171 : vector<1x128xf32>
    %cst_49 = arith.constant 0.000000e+00 : f32
    %173 = vector.broadcast %cst_49 : f32 to vector<1x128xf32>
    %174 = arith.cmpf oge, %172, %173 : vector<1x128xf32>
    %175 = arith.select %174, %160, %157 : vector<1x128xi1>, vector<1x128xf32>
    %c9_i32 = arith.constant 9 : i32
    %cst_50 = arith.constant 5.000000e-01 : f32
    %176 = vector.broadcast %cst_50 : f32 to vector<1x128xf32>
    %177 = arith.mulf %159, %176 : vector<1x128xf32>
    %178 = arith.addf %175, %177 : vector<1x128xf32>
    %179 = vector.broadcast %178 : vector<1x128xf32> to vector<32x128xf32>
    %180 = arith.subf %6, %179 : vector<32x128xf32>
    %cst_51 = arith.constant 0.000000e+00 : f32
    %181 = vector.broadcast %cst_51 : f32 to vector<32x128xf32>
    %182 = arith.maximumf %180, %181 : vector<32x128xf32>
    %183 = math.log %182 : vector<32x128xf32>
    %184 = vector.broadcast %cst_4 : f32 to vector<32x128xf32>
    %185 = arith.mulf %184, %183 : vector<32x128xf32>
    %186 = math.exp %185 : vector<32x128xf32>
    %cst_52 = arith.constant dense<0.000000e+00> : vector<128xf32>
    %187 = vector.multi_reduction <add>, %186, %cst_52 [0] : vector<32x128xf32> to vector<128xf32>
    %188 = vector.shape_cast %187 : vector<128xf32> to vector<1x128xf32>
    %cst_53 = arith.constant 1.000000e+00 : f32
    %189 = vector.broadcast %cst_53 : f32 to vector<1x128xf32>
    %190 = arith.subf %188, %189 : vector<1x128xf32>
    %cst_54 = arith.constant 0.000000e+00 : f32
    %191 = vector.broadcast %cst_54 : f32 to vector<1x128xf32>
    %192 = arith.cmpf oge, %190, %191 : vector<1x128xf32>
    %193 = arith.select %192, %178, %175 : vector<1x128xi1>, vector<1x128xf32>
    %c10_i32 = arith.constant 10 : i32
    %cst_55 = arith.constant 5.000000e-01 : f32
    %194 = vector.broadcast %cst_55 : f32 to vector<1x128xf32>
    %195 = arith.mulf %177, %194 : vector<1x128xf32>
    %196 = arith.addf %193, %195 : vector<1x128xf32>
    %197 = vector.broadcast %196 : vector<1x128xf32> to vector<32x128xf32>
    %198 = arith.subf %6, %197 : vector<32x128xf32>
    %cst_56 = arith.constant 0.000000e+00 : f32
    %199 = vector.broadcast %cst_56 : f32 to vector<32x128xf32>
    %200 = arith.maximumf %198, %199 : vector<32x128xf32>
    %201 = math.log %200 : vector<32x128xf32>
    %202 = vector.broadcast %cst_4 : f32 to vector<32x128xf32>
    %203 = arith.mulf %202, %201 : vector<32x128xf32>
    %204 = math.exp %203 : vector<32x128xf32>
    %cst_57 = arith.constant dense<0.000000e+00> : vector<128xf32>
    %205 = vector.multi_reduction <add>, %204, %cst_57 [0] : vector<32x128xf32> to vector<128xf32>
    %206 = vector.shape_cast %205 : vector<128xf32> to vector<1x128xf32>
    %cst_58 = arith.constant 1.000000e+00 : f32
    %207 = vector.broadcast %cst_58 : f32 to vector<1x128xf32>
    %208 = arith.subf %206, %207 : vector<1x128xf32>
    %cst_59 = arith.constant 0.000000e+00 : f32
    %209 = vector.broadcast %cst_59 : f32 to vector<1x128xf32>
    %210 = arith.cmpf oge, %208, %209 : vector<1x128xf32>
    %211 = arith.select %210, %196, %193 : vector<1x128xi1>, vector<1x128xf32>
    %c11_i32 = arith.constant 11 : i32
    %cst_60 = arith.constant 5.000000e-01 : f32
    %212 = vector.broadcast %cst_60 : f32 to vector<1x128xf32>
    %213 = arith.mulf %195, %212 : vector<1x128xf32>
    %214 = arith.addf %211, %213 : vector<1x128xf32>
    %215 = vector.broadcast %214 : vector<1x128xf32> to vector<32x128xf32>
    %216 = arith.subf %6, %215 : vector<32x128xf32>
    %cst_61 = arith.constant 0.000000e+00 : f32
    %217 = vector.broadcast %cst_61 : f32 to vector<32x128xf32>
    %218 = arith.maximumf %216, %217 : vector<32x128xf32>
    %219 = math.log %218 : vector<32x128xf32>
    %220 = vector.broadcast %cst_4 : f32 to vector<32x128xf32>
    %221 = arith.mulf %220, %219 : vector<32x128xf32>
    %222 = math.exp %221 : vector<32x128xf32>
    %cst_62 = arith.constant dense<0.000000e+00> : vector<128xf32>
    %223 = vector.multi_reduction <add>, %222, %cst_62 [0] : vector<32x128xf32> to vector<128xf32>
    %224 = vector.shape_cast %223 : vector<128xf32> to vector<1x128xf32>
    %cst_63 = arith.constant 1.000000e+00 : f32
    %225 = vector.broadcast %cst_63 : f32 to vector<1x128xf32>
    %226 = arith.subf %224, %225 : vector<1x128xf32>
    %cst_64 = arith.constant 0.000000e+00 : f32
    %227 = vector.broadcast %cst_64 : f32 to vector<1x128xf32>
    %228 = arith.cmpf oge, %226, %227 : vector<1x128xf32>
    %229 = arith.select %228, %214, %211 : vector<1x128xi1>, vector<1x128xf32>
    %c12_i32 = arith.constant 12 : i32
    %cst_65 = arith.constant 5.000000e-01 : f32
    %230 = vector.broadcast %cst_65 : f32 to vector<1x128xf32>
    %231 = arith.mulf %213, %230 : vector<1x128xf32>
    %232 = arith.addf %229, %231 : vector<1x128xf32>
    %233 = vector.broadcast %232 : vector<1x128xf32> to vector<32x128xf32>
    %234 = arith.subf %6, %233 : vector<32x128xf32>
    %cst_66 = arith.constant 0.000000e+00 : f32
    %235 = vector.broadcast %cst_66 : f32 to vector<32x128xf32>
    %236 = arith.maximumf %234, %235 : vector<32x128xf32>
    %237 = math.log %236 : vector<32x128xf32>
    %238 = vector.broadcast %cst_4 : f32 to vector<32x128xf32>
    %239 = arith.mulf %238, %237 : vector<32x128xf32>
    %240 = math.exp %239 : vector<32x128xf32>
    %cst_67 = arith.constant dense<0.000000e+00> : vector<128xf32>
    %241 = vector.multi_reduction <add>, %240, %cst_67 [0] : vector<32x128xf32> to vector<128xf32>
    %242 = vector.shape_cast %241 : vector<128xf32> to vector<1x128xf32>
    %cst_68 = arith.constant 1.000000e+00 : f32
    %243 = vector.broadcast %cst_68 : f32 to vector<1x128xf32>
    %244 = arith.subf %242, %243 : vector<1x128xf32>
    %cst_69 = arith.constant 0.000000e+00 : f32
    %245 = vector.broadcast %cst_69 : f32 to vector<1x128xf32>
    %246 = arith.cmpf oge, %244, %245 : vector<1x128xf32>
    %247 = arith.select %246, %232, %229 : vector<1x128xi1>, vector<1x128xf32>
    %c13_i32 = arith.constant 13 : i32
    %cst_70 = arith.constant 5.000000e-01 : f32
    %248 = vector.broadcast %cst_70 : f32 to vector<1x128xf32>
    %249 = arith.mulf %231, %248 : vector<1x128xf32>
    %250 = arith.addf %247, %249 : vector<1x128xf32>
    %251 = vector.broadcast %250 : vector<1x128xf32> to vector<32x128xf32>
    %252 = arith.subf %6, %251 : vector<32x128xf32>
    %cst_71 = arith.constant 0.000000e+00 : f32
    %253 = vector.broadcast %cst_71 : f32 to vector<32x128xf32>
    %254 = arith.maximumf %252, %253 : vector<32x128xf32>
    %255 = math.log %254 : vector<32x128xf32>
    %256 = vector.broadcast %cst_4 : f32 to vector<32x128xf32>
    %257 = arith.mulf %256, %255 : vector<32x128xf32>
    %258 = math.exp %257 : vector<32x128xf32>
    %cst_72 = arith.constant dense<0.000000e+00> : vector<128xf32>
    %259 = vector.multi_reduction <add>, %258, %cst_72 [0] : vector<32x128xf32> to vector<128xf32>
    %260 = vector.shape_cast %259 : vector<128xf32> to vector<1x128xf32>
    %cst_73 = arith.constant 1.000000e+00 : f32
    %261 = vector.broadcast %cst_73 : f32 to vector<1x128xf32>
    %262 = arith.subf %260, %261 : vector<1x128xf32>
    %cst_74 = arith.constant 0.000000e+00 : f32
    %263 = vector.broadcast %cst_74 : f32 to vector<1x128xf32>
    %264 = arith.cmpf oge, %262, %263 : vector<1x128xf32>
    %265 = arith.select %264, %250, %247 : vector<1x128xi1>, vector<1x128xf32>
    %c14_i32 = arith.constant 14 : i32
    %cst_75 = arith.constant 5.000000e-01 : f32
    %266 = vector.broadcast %cst_75 : f32 to vector<1x128xf32>
    %267 = arith.mulf %249, %266 : vector<1x128xf32>
    %268 = arith.addf %265, %267 : vector<1x128xf32>
    %269 = vector.broadcast %268 : vector<1x128xf32> to vector<32x128xf32>
    %270 = arith.subf %6, %269 : vector<32x128xf32>
    %cst_76 = arith.constant 0.000000e+00 : f32
    %271 = vector.broadcast %cst_76 : f32 to vector<32x128xf32>
    %272 = arith.maximumf %270, %271 : vector<32x128xf32>
    %273 = math.log %272 : vector<32x128xf32>
    %274 = vector.broadcast %cst_4 : f32 to vector<32x128xf32>
    %275 = arith.mulf %274, %273 : vector<32x128xf32>
    %276 = math.exp %275 : vector<32x128xf32>
    %cst_77 = arith.constant dense<0.000000e+00> : vector<128xf32>
    %277 = vector.multi_reduction <add>, %276, %cst_77 [0] : vector<32x128xf32> to vector<128xf32>
    %278 = vector.shape_cast %277 : vector<128xf32> to vector<1x128xf32>
    %cst_78 = arith.constant 1.000000e+00 : f32
    %279 = vector.broadcast %cst_78 : f32 to vector<1x128xf32>
    %280 = arith.subf %278, %279 : vector<1x128xf32>
    %cst_79 = arith.constant 0.000000e+00 : f32
    %281 = vector.broadcast %cst_79 : f32 to vector<1x128xf32>
    %282 = arith.cmpf oge, %280, %281 : vector<1x128xf32>
    %283 = arith.select %282, %268, %265 : vector<1x128xi1>, vector<1x128xf32>
    %c15_i32 = arith.constant 15 : i32
    %cst_80 = arith.constant 5.000000e-01 : f32
    %284 = vector.broadcast %cst_80 : f32 to vector<1x128xf32>
    %285 = arith.mulf %267, %284 : vector<1x128xf32>
    %286 = arith.addf %283, %285 : vector<1x128xf32>
    %287 = vector.broadcast %286 : vector<1x128xf32> to vector<32x128xf32>
    %288 = arith.subf %6, %287 : vector<32x128xf32>
    %cst_81 = arith.constant 0.000000e+00 : f32
    %289 = vector.broadcast %cst_81 : f32 to vector<32x128xf32>
    %290 = arith.maximumf %288, %289 : vector<32x128xf32>
    %291 = math.log %290 : vector<32x128xf32>
    %292 = vector.broadcast %cst_4 : f32 to vector<32x128xf32>
    %293 = arith.mulf %292, %291 : vector<32x128xf32>
    %294 = math.exp %293 : vector<32x128xf32>
    %cst_82 = arith.constant dense<0.000000e+00> : vector<128xf32>
    %295 = vector.multi_reduction <add>, %294, %cst_82 [0] : vector<32x128xf32> to vector<128xf32>
    %296 = vector.shape_cast %295 : vector<128xf32> to vector<1x128xf32>
    %cst_83 = arith.constant 1.000000e+00 : f32
    %297 = vector.broadcast %cst_83 : f32 to vector<1x128xf32>
    %298 = arith.subf %296, %297 : vector<1x128xf32>
    %cst_84 = arith.constant 0.000000e+00 : f32
    %299 = vector.broadcast %cst_84 : f32 to vector<1x128xf32>
    %300 = arith.cmpf oge, %298, %299 : vector<1x128xf32>
    %301 = arith.select %300, %286, %283 : vector<1x128xi1>, vector<1x128xf32>
    %c16_i32 = arith.constant 16 : i32
    %cst_85 = arith.constant 5.000000e-01 : f32
    %302 = vector.broadcast %cst_85 : f32 to vector<1x128xf32>
    %303 = arith.mulf %285, %302 : vector<1x128xf32>
    %304 = arith.addf %301, %303 : vector<1x128xf32>
    %305 = vector.broadcast %304 : vector<1x128xf32> to vector<32x128xf32>
    %306 = arith.subf %6, %305 : vector<32x128xf32>
    %cst_86 = arith.constant 0.000000e+00 : f32
    %307 = vector.broadcast %cst_86 : f32 to vector<32x128xf32>
    %308 = arith.maximumf %306, %307 : vector<32x128xf32>
    %309 = math.log %308 : vector<32x128xf32>
    %310 = vector.broadcast %cst_4 : f32 to vector<32x128xf32>
    %311 = arith.mulf %310, %309 : vector<32x128xf32>
    %312 = math.exp %311 : vector<32x128xf32>
    %cst_87 = arith.constant dense<0.000000e+00> : vector<128xf32>
    %313 = vector.multi_reduction <add>, %312, %cst_87 [0] : vector<32x128xf32> to vector<128xf32>
    %314 = vector.shape_cast %313 : vector<128xf32> to vector<1x128xf32>
    %cst_88 = arith.constant 1.000000e+00 : f32
    %315 = vector.broadcast %cst_88 : f32 to vector<1x128xf32>
    %316 = arith.subf %314, %315 : vector<1x128xf32>
    %cst_89 = arith.constant 0.000000e+00 : f32
    %317 = vector.broadcast %cst_89 : f32 to vector<1x128xf32>
    %318 = arith.cmpf oge, %316, %317 : vector<1x128xf32>
    %319 = arith.select %318, %304, %301 : vector<1x128xi1>, vector<1x128xf32>
    %c17_i32 = arith.constant 17 : i32
    %cst_90 = arith.constant 5.000000e-01 : f32
    %320 = vector.broadcast %cst_90 : f32 to vector<1x128xf32>
    %321 = arith.mulf %303, %320 : vector<1x128xf32>
    %322 = arith.addf %319, %321 : vector<1x128xf32>
    %323 = vector.broadcast %322 : vector<1x128xf32> to vector<32x128xf32>
    %324 = arith.subf %6, %323 : vector<32x128xf32>
    %cst_91 = arith.constant 0.000000e+00 : f32
    %325 = vector.broadcast %cst_91 : f32 to vector<32x128xf32>
    %326 = arith.maximumf %324, %325 : vector<32x128xf32>
    %327 = math.log %326 : vector<32x128xf32>
    %328 = vector.broadcast %cst_4 : f32 to vector<32x128xf32>
    %329 = arith.mulf %328, %327 : vector<32x128xf32>
    %330 = math.exp %329 : vector<32x128xf32>
    %cst_92 = arith.constant dense<0.000000e+00> : vector<128xf32>
    %331 = vector.multi_reduction <add>, %330, %cst_92 [0] : vector<32x128xf32> to vector<128xf32>
    %332 = vector.shape_cast %331 : vector<128xf32> to vector<1x128xf32>
    %cst_93 = arith.constant 1.000000e+00 : f32
    %333 = vector.broadcast %cst_93 : f32 to vector<1x128xf32>
    %334 = arith.subf %332, %333 : vector<1x128xf32>
    %cst_94 = arith.constant 0.000000e+00 : f32
    %335 = vector.broadcast %cst_94 : f32 to vector<1x128xf32>
    %336 = arith.cmpf oge, %334, %335 : vector<1x128xf32>
    %337 = arith.select %336, %322, %319 : vector<1x128xi1>, vector<1x128xf32>
    %c18_i32 = arith.constant 18 : i32
    %cst_95 = arith.constant 5.000000e-01 : f32
    %338 = vector.broadcast %cst_95 : f32 to vector<1x128xf32>
    %339 = arith.mulf %321, %338 : vector<1x128xf32>
    %340 = arith.addf %337, %339 : vector<1x128xf32>
    %341 = vector.broadcast %340 : vector<1x128xf32> to vector<32x128xf32>
    %342 = arith.subf %6, %341 : vector<32x128xf32>
    %cst_96 = arith.constant 0.000000e+00 : f32
    %343 = vector.broadcast %cst_96 : f32 to vector<32x128xf32>
    %344 = arith.maximumf %342, %343 : vector<32x128xf32>
    %345 = math.log %344 : vector<32x128xf32>
    %346 = vector.broadcast %cst_4 : f32 to vector<32x128xf32>
    %347 = arith.mulf %346, %345 : vector<32x128xf32>
    %348 = math.exp %347 : vector<32x128xf32>
    %cst_97 = arith.constant dense<0.000000e+00> : vector<128xf32>
    %349 = vector.multi_reduction <add>, %348, %cst_97 [0] : vector<32x128xf32> to vector<128xf32>
    %350 = vector.shape_cast %349 : vector<128xf32> to vector<1x128xf32>
    %cst_98 = arith.constant 1.000000e+00 : f32
    %351 = vector.broadcast %cst_98 : f32 to vector<1x128xf32>
    %352 = arith.subf %350, %351 : vector<1x128xf32>
    %cst_99 = arith.constant 0.000000e+00 : f32
    %353 = vector.broadcast %cst_99 : f32 to vector<1x128xf32>
    %354 = arith.cmpf oge, %352, %353 : vector<1x128xf32>
    %355 = arith.select %354, %340, %337 : vector<1x128xi1>, vector<1x128xf32>
    %c19_i32 = arith.constant 19 : i32
    %cst_100 = arith.constant 5.000000e-01 : f32
    %356 = vector.broadcast %cst_100 : f32 to vector<1x128xf32>
    %357 = arith.mulf %339, %356 : vector<1x128xf32>
    %358 = arith.addf %355, %357 : vector<1x128xf32>
    %359 = vector.broadcast %358 : vector<1x128xf32> to vector<32x128xf32>
    %360 = arith.subf %6, %359 : vector<32x128xf32>
    %cst_101 = arith.constant 0.000000e+00 : f32
    %361 = vector.broadcast %cst_101 : f32 to vector<32x128xf32>
    %362 = arith.maximumf %360, %361 : vector<32x128xf32>
    %363 = math.log %362 : vector<32x128xf32>
    %364 = vector.broadcast %cst_4 : f32 to vector<32x128xf32>
    %365 = arith.mulf %364, %363 : vector<32x128xf32>
    %366 = math.exp %365 : vector<32x128xf32>
    %cst_102 = arith.constant dense<0.000000e+00> : vector<128xf32>
    %367 = vector.multi_reduction <add>, %366, %cst_102 [0] : vector<32x128xf32> to vector<128xf32>
    %368 = vector.shape_cast %367 : vector<128xf32> to vector<1x128xf32>
    %cst_103 = arith.constant 1.000000e+00 : f32
    %369 = vector.broadcast %cst_103 : f32 to vector<1x128xf32>
    %370 = arith.subf %368, %369 : vector<1x128xf32>
    %cst_104 = arith.constant 0.000000e+00 : f32
    %371 = vector.broadcast %cst_104 : f32 to vector<1x128xf32>
    %372 = arith.cmpf oge, %370, %371 : vector<1x128xf32>
    %373 = arith.select %372, %358, %355 : vector<1x128xi1>, vector<1x128xf32>
    %c20_i32 = arith.constant 20 : i32
    %cst_105 = arith.constant 5.000000e-01 : f32
    %374 = vector.broadcast %cst_105 : f32 to vector<1x128xf32>
    %375 = arith.mulf %357, %374 : vector<1x128xf32>
    %376 = arith.addf %373, %375 : vector<1x128xf32>
    %377 = vector.broadcast %376 : vector<1x128xf32> to vector<32x128xf32>
    %378 = arith.subf %6, %377 : vector<32x128xf32>
    %cst_106 = arith.constant 0.000000e+00 : f32
    %379 = vector.broadcast %cst_106 : f32 to vector<32x128xf32>
    %380 = arith.maximumf %378, %379 : vector<32x128xf32>
    %381 = math.log %380 : vector<32x128xf32>
    %382 = vector.broadcast %cst_4 : f32 to vector<32x128xf32>
    %383 = arith.mulf %382, %381 : vector<32x128xf32>
    %384 = math.exp %383 : vector<32x128xf32>
    %cst_107 = arith.constant dense<0.000000e+00> : vector<128xf32>
    %385 = vector.multi_reduction <add>, %384, %cst_107 [0] : vector<32x128xf32> to vector<128xf32>
    %386 = vector.shape_cast %385 : vector<128xf32> to vector<1x128xf32>
    %cst_108 = arith.constant 1.000000e+00 : f32
    %387 = vector.broadcast %cst_108 : f32 to vector<1x128xf32>
    %388 = arith.subf %386, %387 : vector<1x128xf32>
    %cst_109 = arith.constant 0.000000e+00 : f32
    %389 = vector.broadcast %cst_109 : f32 to vector<1x128xf32>
    %390 = arith.cmpf oge, %388, %389 : vector<1x128xf32>
    %391 = arith.select %390, %376, %373 : vector<1x128xi1>, vector<1x128xf32>
    %c21_i32 = arith.constant 21 : i32
    %cst_110 = arith.constant 5.000000e-01 : f32
    %392 = vector.broadcast %cst_110 : f32 to vector<1x128xf32>
    %393 = arith.mulf %375, %392 : vector<1x128xf32>
    %394 = arith.addf %391, %393 : vector<1x128xf32>
    %395 = vector.broadcast %394 : vector<1x128xf32> to vector<32x128xf32>
    %396 = arith.subf %6, %395 : vector<32x128xf32>
    %cst_111 = arith.constant 0.000000e+00 : f32
    %397 = vector.broadcast %cst_111 : f32 to vector<32x128xf32>
    %398 = arith.maximumf %396, %397 : vector<32x128xf32>
    %399 = math.log %398 : vector<32x128xf32>
    %400 = vector.broadcast %cst_4 : f32 to vector<32x128xf32>
    %401 = arith.mulf %400, %399 : vector<32x128xf32>
    %402 = math.exp %401 : vector<32x128xf32>
    %cst_112 = arith.constant dense<0.000000e+00> : vector<128xf32>
    %403 = vector.multi_reduction <add>, %402, %cst_112 [0] : vector<32x128xf32> to vector<128xf32>
    %404 = vector.shape_cast %403 : vector<128xf32> to vector<1x128xf32>
    %cst_113 = arith.constant 1.000000e+00 : f32
    %405 = vector.broadcast %cst_113 : f32 to vector<1x128xf32>
    %406 = arith.subf %404, %405 : vector<1x128xf32>
    %cst_114 = arith.constant 0.000000e+00 : f32
    %407 = vector.broadcast %cst_114 : f32 to vector<1x128xf32>
    %408 = arith.cmpf oge, %406, %407 : vector<1x128xf32>
    %409 = arith.select %408, %394, %391 : vector<1x128xi1>, vector<1x128xf32>
    %c22_i32 = arith.constant 22 : i32
    %cst_115 = arith.constant 5.000000e-01 : f32
    %410 = vector.broadcast %cst_115 : f32 to vector<1x128xf32>
    %411 = arith.mulf %393, %410 : vector<1x128xf32>
    %412 = arith.addf %409, %411 : vector<1x128xf32>
    %413 = vector.broadcast %412 : vector<1x128xf32> to vector<32x128xf32>
    %414 = arith.subf %6, %413 : vector<32x128xf32>
    %cst_116 = arith.constant 0.000000e+00 : f32
    %415 = vector.broadcast %cst_116 : f32 to vector<32x128xf32>
    %416 = arith.maximumf %414, %415 : vector<32x128xf32>
    %417 = math.log %416 : vector<32x128xf32>
    %418 = vector.broadcast %cst_4 : f32 to vector<32x128xf32>
    %419 = arith.mulf %418, %417 : vector<32x128xf32>
    %420 = math.exp %419 : vector<32x128xf32>
    %cst_117 = arith.constant dense<0.000000e+00> : vector<128xf32>
    %421 = vector.multi_reduction <add>, %420, %cst_117 [0] : vector<32x128xf32> to vector<128xf32>
    %422 = vector.shape_cast %421 : vector<128xf32> to vector<1x128xf32>
    %cst_118 = arith.constant 1.000000e+00 : f32
    %423 = vector.broadcast %cst_118 : f32 to vector<1x128xf32>
    %424 = arith.subf %422, %423 : vector<1x128xf32>
    %cst_119 = arith.constant 0.000000e+00 : f32
    %425 = vector.broadcast %cst_119 : f32 to vector<1x128xf32>
    %426 = arith.cmpf oge, %424, %425 : vector<1x128xf32>
    %427 = arith.select %426, %412, %409 : vector<1x128xi1>, vector<1x128xf32>
    %c23_i32 = arith.constant 23 : i32
    %cst_120 = arith.constant 5.000000e-01 : f32
    %428 = vector.broadcast %cst_120 : f32 to vector<1x128xf32>
    %429 = arith.mulf %411, %428 : vector<1x128xf32>
    %430 = arith.addf %427, %429 : vector<1x128xf32>
    %431 = vector.broadcast %430 : vector<1x128xf32> to vector<32x128xf32>
    %432 = arith.subf %6, %431 : vector<32x128xf32>
    %cst_121 = arith.constant 0.000000e+00 : f32
    %433 = vector.broadcast %cst_121 : f32 to vector<32x128xf32>
    %434 = arith.maximumf %432, %433 : vector<32x128xf32>
    %435 = math.log %434 : vector<32x128xf32>
    %436 = vector.broadcast %cst_4 : f32 to vector<32x128xf32>
    %437 = arith.mulf %436, %435 : vector<32x128xf32>
    %438 = math.exp %437 : vector<32x128xf32>
    %cst_122 = arith.constant dense<0.000000e+00> : vector<128xf32>
    %439 = vector.multi_reduction <add>, %438, %cst_122 [0] : vector<32x128xf32> to vector<128xf32>
    %440 = vector.shape_cast %439 : vector<128xf32> to vector<1x128xf32>
    %cst_123 = arith.constant 1.000000e+00 : f32
    %441 = vector.broadcast %cst_123 : f32 to vector<1x128xf32>
    %442 = arith.subf %440, %441 : vector<1x128xf32>
    %cst_124 = arith.constant 0.000000e+00 : f32
    %443 = vector.broadcast %cst_124 : f32 to vector<1x128xf32>
    %444 = arith.cmpf oge, %442, %443 : vector<1x128xf32>
    %445 = arith.select %444, %430, %427 : vector<1x128xi1>, vector<1x128xf32>
    %c24_i32 = arith.constant 24 : i32
    %cst_125 = arith.constant 5.000000e-01 : f32
    %446 = vector.broadcast %cst_125 : f32 to vector<1x128xf32>
    %447 = arith.mulf %429, %446 : vector<1x128xf32>
    %448 = arith.addf %445, %447 : vector<1x128xf32>
    %449 = vector.broadcast %448 : vector<1x128xf32> to vector<32x128xf32>
    %450 = arith.subf %6, %449 : vector<32x128xf32>
    %cst_126 = arith.constant 0.000000e+00 : f32
    %451 = vector.broadcast %cst_126 : f32 to vector<32x128xf32>
    %452 = arith.maximumf %450, %451 : vector<32x128xf32>
    %453 = math.log %452 : vector<32x128xf32>
    %454 = vector.broadcast %cst_4 : f32 to vector<32x128xf32>
    %455 = arith.mulf %454, %453 : vector<32x128xf32>
    %456 = math.exp %455 : vector<32x128xf32>
    %cst_127 = arith.constant dense<0.000000e+00> : vector<128xf32>
    %457 = vector.multi_reduction <add>, %456, %cst_127 [0] : vector<32x128xf32> to vector<128xf32>
    %458 = vector.shape_cast %457 : vector<128xf32> to vector<1x128xf32>
    %cst_128 = arith.constant 1.000000e+00 : f32
    %459 = vector.broadcast %cst_128 : f32 to vector<1x128xf32>
    %460 = arith.subf %458, %459 : vector<1x128xf32>
    %cst_129 = arith.constant 0.000000e+00 : f32
    %461 = vector.broadcast %cst_129 : f32 to vector<1x128xf32>
    %462 = arith.cmpf oge, %460, %461 : vector<1x128xf32>
    %463 = arith.select %462, %448, %445 : vector<1x128xi1>, vector<1x128xf32>
    %c25_i32 = arith.constant 25 : i32
    %cst_130 = arith.constant 5.000000e-01 : f32
    %464 = vector.broadcast %cst_130 : f32 to vector<1x128xf32>
    %465 = arith.mulf %447, %464 : vector<1x128xf32>
    %466 = arith.addf %463, %465 : vector<1x128xf32>
    %467 = vector.broadcast %466 : vector<1x128xf32> to vector<32x128xf32>
    %468 = arith.subf %6, %467 : vector<32x128xf32>
    %cst_131 = arith.constant 0.000000e+00 : f32
    %469 = vector.broadcast %cst_131 : f32 to vector<32x128xf32>
    %470 = arith.maximumf %468, %469 : vector<32x128xf32>
    %471 = math.log %470 : vector<32x128xf32>
    %472 = vector.broadcast %cst_4 : f32 to vector<32x128xf32>
    %473 = arith.mulf %472, %471 : vector<32x128xf32>
    %474 = math.exp %473 : vector<32x128xf32>
    %cst_132 = arith.constant dense<0.000000e+00> : vector<128xf32>
    %475 = vector.multi_reduction <add>, %474, %cst_132 [0] : vector<32x128xf32> to vector<128xf32>
    %476 = vector.shape_cast %475 : vector<128xf32> to vector<1x128xf32>
    %cst_133 = arith.constant 1.000000e+00 : f32
    %477 = vector.broadcast %cst_133 : f32 to vector<1x128xf32>
    %478 = arith.subf %476, %477 : vector<1x128xf32>
    %cst_134 = arith.constant 0.000000e+00 : f32
    %479 = vector.broadcast %cst_134 : f32 to vector<1x128xf32>
    %480 = arith.cmpf oge, %478, %479 : vector<1x128xf32>
    %481 = arith.select %480, %466, %463 : vector<1x128xi1>, vector<1x128xf32>
    %c26_i32 = arith.constant 26 : i32
    %cst_135 = arith.constant 5.000000e-01 : f32
    %482 = vector.broadcast %cst_135 : f32 to vector<1x128xf32>
    %483 = arith.mulf %465, %482 : vector<1x128xf32>
    %484 = arith.addf %481, %483 : vector<1x128xf32>
    %485 = vector.broadcast %484 : vector<1x128xf32> to vector<32x128xf32>
    %486 = arith.subf %6, %485 : vector<32x128xf32>
    %cst_136 = arith.constant 0.000000e+00 : f32
    %487 = vector.broadcast %cst_136 : f32 to vector<32x128xf32>
    %488 = arith.maximumf %486, %487 : vector<32x128xf32>
    %489 = math.log %488 : vector<32x128xf32>
    %490 = vector.broadcast %cst_4 : f32 to vector<32x128xf32>
    %491 = arith.mulf %490, %489 : vector<32x128xf32>
    %492 = math.exp %491 : vector<32x128xf32>
    %cst_137 = arith.constant dense<0.000000e+00> : vector<128xf32>
    %493 = vector.multi_reduction <add>, %492, %cst_137 [0] : vector<32x128xf32> to vector<128xf32>
    %494 = vector.shape_cast %493 : vector<128xf32> to vector<1x128xf32>
    %cst_138 = arith.constant 1.000000e+00 : f32
    %495 = vector.broadcast %cst_138 : f32 to vector<1x128xf32>
    %496 = arith.subf %494, %495 : vector<1x128xf32>
    %cst_139 = arith.constant 0.000000e+00 : f32
    %497 = vector.broadcast %cst_139 : f32 to vector<1x128xf32>
    %498 = arith.cmpf oge, %496, %497 : vector<1x128xf32>
    %499 = arith.select %498, %484, %481 : vector<1x128xi1>, vector<1x128xf32>
    %c27_i32 = arith.constant 27 : i32
    %cst_140 = arith.constant 5.000000e-01 : f32
    %500 = vector.broadcast %cst_140 : f32 to vector<1x128xf32>
    %501 = arith.mulf %483, %500 : vector<1x128xf32>
    %502 = arith.addf %499, %501 : vector<1x128xf32>
    %503 = vector.broadcast %502 : vector<1x128xf32> to vector<32x128xf32>
    %504 = arith.subf %6, %503 : vector<32x128xf32>
    %cst_141 = arith.constant 0.000000e+00 : f32
    %505 = vector.broadcast %cst_141 : f32 to vector<32x128xf32>
    %506 = arith.maximumf %504, %505 : vector<32x128xf32>
    %507 = math.log %506 : vector<32x128xf32>
    %508 = vector.broadcast %cst_4 : f32 to vector<32x128xf32>
    %509 = arith.mulf %508, %507 : vector<32x128xf32>
    %510 = math.exp %509 : vector<32x128xf32>
    %cst_142 = arith.constant dense<0.000000e+00> : vector<128xf32>
    %511 = vector.multi_reduction <add>, %510, %cst_142 [0] : vector<32x128xf32> to vector<128xf32>
    %512 = vector.shape_cast %511 : vector<128xf32> to vector<1x128xf32>
    %cst_143 = arith.constant 1.000000e+00 : f32
    %513 = vector.broadcast %cst_143 : f32 to vector<1x128xf32>
    %514 = arith.subf %512, %513 : vector<1x128xf32>
    %cst_144 = arith.constant 0.000000e+00 : f32
    %515 = vector.broadcast %cst_144 : f32 to vector<1x128xf32>
    %516 = arith.cmpf oge, %514, %515 : vector<1x128xf32>
    %517 = arith.select %516, %502, %499 : vector<1x128xi1>, vector<1x128xf32>
    %c28_i32 = arith.constant 28 : i32
    %cst_145 = arith.constant 5.000000e-01 : f32
    %518 = vector.broadcast %cst_145 : f32 to vector<1x128xf32>
    %519 = arith.mulf %501, %518 : vector<1x128xf32>
    %520 = arith.addf %517, %519 : vector<1x128xf32>
    %521 = vector.broadcast %520 : vector<1x128xf32> to vector<32x128xf32>
    %522 = arith.subf %6, %521 : vector<32x128xf32>
    %cst_146 = arith.constant 0.000000e+00 : f32
    %523 = vector.broadcast %cst_146 : f32 to vector<32x128xf32>
    %524 = arith.maximumf %522, %523 : vector<32x128xf32>
    %525 = math.log %524 : vector<32x128xf32>
    %526 = vector.broadcast %cst_4 : f32 to vector<32x128xf32>
    %527 = arith.mulf %526, %525 : vector<32x128xf32>
    %528 = math.exp %527 : vector<32x128xf32>
    %cst_147 = arith.constant dense<0.000000e+00> : vector<128xf32>
    %529 = vector.multi_reduction <add>, %528, %cst_147 [0] : vector<32x128xf32> to vector<128xf32>
    %530 = vector.shape_cast %529 : vector<128xf32> to vector<1x128xf32>
    %cst_148 = arith.constant 1.000000e+00 : f32
    %531 = vector.broadcast %cst_148 : f32 to vector<1x128xf32>
    %532 = arith.subf %530, %531 : vector<1x128xf32>
    %cst_149 = arith.constant 0.000000e+00 : f32
    %533 = vector.broadcast %cst_149 : f32 to vector<1x128xf32>
    %534 = arith.cmpf oge, %532, %533 : vector<1x128xf32>
    %535 = arith.select %534, %520, %517 : vector<1x128xi1>, vector<1x128xf32>
    %c29_i32 = arith.constant 29 : i32
    %cst_150 = arith.constant 5.000000e-01 : f32
    %536 = vector.broadcast %cst_150 : f32 to vector<1x128xf32>
    %537 = arith.mulf %519, %536 : vector<1x128xf32>
    %538 = arith.addf %535, %537 : vector<1x128xf32>
    %539 = vector.broadcast %538 : vector<1x128xf32> to vector<32x128xf32>
    %540 = arith.subf %6, %539 : vector<32x128xf32>
    %cst_151 = arith.constant 0.000000e+00 : f32
    %541 = vector.broadcast %cst_151 : f32 to vector<32x128xf32>
    %542 = arith.maximumf %540, %541 : vector<32x128xf32>
    %543 = math.log %542 : vector<32x128xf32>
    %544 = vector.broadcast %cst_4 : f32 to vector<32x128xf32>
    %545 = arith.mulf %544, %543 : vector<32x128xf32>
    %546 = math.exp %545 : vector<32x128xf32>
    %cst_152 = arith.constant dense<0.000000e+00> : vector<128xf32>
    %547 = vector.multi_reduction <add>, %546, %cst_152 [0] : vector<32x128xf32> to vector<128xf32>
    %548 = vector.shape_cast %547 : vector<128xf32> to vector<1x128xf32>
    %cst_153 = arith.constant 1.000000e+00 : f32
    %549 = vector.broadcast %cst_153 : f32 to vector<1x128xf32>
    %550 = arith.subf %548, %549 : vector<1x128xf32>
    %cst_154 = arith.constant 0.000000e+00 : f32
    %551 = vector.broadcast %cst_154 : f32 to vector<1x128xf32>
    %552 = arith.cmpf oge, %550, %551 : vector<1x128xf32>
    %553 = arith.select %552, %538, %535 : vector<1x128xi1>, vector<1x128xf32>
    %554 = vector.broadcast %538 : vector<1x128xf32> to vector<32x128xf32>
    %555 = arith.subf %6, %554 : vector<32x128xf32>
    %cst_155 = arith.constant 0.000000e+00 : f32
    %556 = vector.broadcast %cst_155 : f32 to vector<32x128xf32>
    %557 = arith.maximumf %555, %556 : vector<32x128xf32>
    %558 = math.log %557 : vector<32x128xf32>
    %cst_156 = arith.constant 0.0322580636 : f32
    %559 = vector.broadcast %cst_156 : f32 to vector<32x128xf32>
    %560 = arith.mulf %559, %558 : vector<32x128xf32>
    %561 = math.exp %560 : vector<32x128xf32>
    %cst_157 = arith.constant dense<0.000000e+00> : vector<128xf32>
    %562 = vector.multi_reduction <add>, %561, %cst_157 [0] : vector<32x128xf32> to vector<128xf32>
    %563 = vector.shape_cast %562 : vector<128xf32> to vector<1x128xf32>
    %564 = arith.mulf %561, %561 : vector<32x128xf32>
    %cst_158 = arith.constant dense<0.000000e+00> : vector<128xf32>
    %565 = vector.multi_reduction <add>, %564, %cst_158 [0] : vector<32x128xf32> to vector<128xf32>
    %566 = vector.shape_cast %565 : vector<128xf32> to vector<1x128xf32>
    %567 = arith.mulf %561, %6 : vector<32x128xf32>
    %cst_159 = arith.constant dense<0.000000e+00> : vector<128xf32>
    %568 = vector.multi_reduction <add>, %567, %cst_159 [0] : vector<32x128xf32> to vector<128xf32>
    %569 = vector.shape_cast %568 : vector<128xf32> to vector<1x128xf32>
    %570 = tpu.reciprocal %563 {approx = true} : vector<1x128xf32> -> vector<1x128xf32>
    %571 = arith.mulf %563, %570 : vector<1x128xf32>
    %cst_160 = arith.constant 2.000000e+00 : f32
    %572 = vector.broadcast %cst_160 : f32 to vector<1x128xf32>
    %573 = arith.subf %572, %571 : vector<1x128xf32>
    %574 = arith.mulf %570, %573 : vector<1x128xf32>
    %575 = arith.mulf %566, %574 : vector<1x128xf32>
    %576 = arith.mulf %575, %574 : vector<1x128xf32>
    %cst_161 = arith.constant 1.000000e+00 : f32
    %577 = vector.broadcast %cst_161 : f32 to vector<1x128xf32>
    %578 = arith.subf %577, %576 : vector<1x128xf32>
    %cst_162 = arith.constant 5.000000e-01 : f32
    %579 = vector.broadcast %cst_162 : f32 to vector<1x128xf32>
    %580 = arith.mulf %578, %579 : vector<1x128xf32>
    %c0_163 = arith.constant 0 : index
    %c0_164 = arith.constant 0 : index
    %581 = vector.load %arg2[%c0_163, %c0_164] : memref<1x128xi32, #tpu.memory_space<vmem>>, vector<1x128xi32>
    %582 = tpu.iota {dimensions = array<i32: 0>} : vector<32x128xi32>
    %583 = vector.broadcast %581 : vector<1x128xi32> to vector<32x128xi32>
    %584 = arith.cmpi eq, %582, %583 : vector<32x128xi32>
    %cst_165 = arith.constant 0.000000e+00 : f32
    %585 = vector.broadcast %cst_165 : f32 to vector<32x128xf32>
    %586 = arith.select %584, %6, %585 : vector<32x128xi1>, vector<32x128xf32>
    %cst_166 = arith.constant dense<0.000000e+00> : vector<128xf32>
    %587 = vector.multi_reduction <add>, %586, %cst_166 [0] : vector<32x128xf32> to vector<128xf32>
    %588 = vector.shape_cast %587 : vector<128xf32> to vector<1x128xf32>
    %589 = arith.mulf %569, %574 : vector<1x128xf32>
    %590 = arith.addf %580, %589 : vector<1x128xf32>
    %591 = arith.subf %590, %588 : vector<1x128xf32>
    %c0_167 = arith.constant 0 : index
    %c0_168 = arith.constant 0 : index
    %592 = vector.load %arg3[%c0_167, %c0_168] : memref<1x128xf32, #tpu.memory_space<vmem>>, vector<1x128xf32>
    tpu.vector_store %arg3[%c0_167, %c0_168], %591 {strides = array<i32>} : memref<1x128xf32, #tpu.memory_space<vmem>>, vector<1x128xf32>,
    return
  }
  func.func @transform_0(%arg0: i32) -> (i32, i32) {
    %c0_i32 = arith.constant 0 : i32
    %c0_i32_0 = arith.constant 0 : i32
    return %arg0, %c0_i32 : i32, i32
  }
  func.func @transform_1(%arg0: i32) -> (i32, i32) {
    %c0_i32 = arith.constant 0 : i32
    %c0_i32_0 = arith.constant 0 : i32
    return %c0_i32, %arg0 : i32, i32
  }
  func.func @transform_2(%arg0: i32) -> (i32, i32) {
    %c0_i32 = arith.constant 0 : i32
    %c0_i32_0 = arith.constant 0 : i32
    return %c0_i32, %arg0 : i32, i32
  }
}

</mosaic_0001>

<llo_original>
// kernel: tpu_custom_call.1
$region0: #{tpu_custom_call.1}
  #allocation0 [shape = 'u32[]', space=smem, size = 0x4, offset = 0x4, fixed_abs, tag = 'smem constant byte address 0x4 - core index']
  #allocation1 [shape = 'u32[144,128]{1,0:T(1,128)}', space=vmem, size = 0x12000, scoped, tag = 'internal scratch']
  #allocation2 [shape = 'f32[32,128]{1,0:T(8,128)}', space=vmem, size = 0x4000, scoped, tag = 'scratch operand']
  %s0 = inlined_call_operand.hbm [shape: f32[16,32], index: 0, kind: input, shape index: {}]
  %s1 = inlined_call_operand.vmem [shape: s32[1,16], index: 1, kind: input, shape index: {}]
  %s2 = inlined_call_operand.hbm [shape: f32[1,16], index: 2, kind: output, shape index: {}]
  %s3 = sld [smem:[#allocation0]]
  $region22: #{tpu_custom_call.1} parent=0
    _
  %s5 = ssub.s32 1, %s3
  %s6 = scalar_select 0, %s5, %s3
  $region1: #{tpu_custom_call.1} parent=0
    #allocation3 [shape = 'u8[65536]{0}', space=vmem, size = 0x10000, scoped, tag = 'input window, operand 0, single buffered']
    #allocation4 [shape = 's32[1]{0}', space=sflag, size = 0x4, scoped, tag = 'scoped memory for tpu_custom_call.1']
    #allocation5 [shape = 's32[1]{0}', space=sflag, size = 0x4, scoped, tag = 'scoped memory for tpu_custom_call.1']
    #allocation6 [shape = 'u8[512]{0}', space=vmem, size = 0x400, scoped, tag = 'output window, operand 0, single buffered']
    %7 = vsyncpa [#allocation4], 0
    %8 = vsyncpa [#allocation5], 0
    // Predicated region
    $region2: #{tpu_custom_call.1} parent=1 // pred_check
      _
    $region3: #{tpu_custom_call.1} parent=1 // pred_check_branch
      %10 = sbr.rel (0) target = $region5
    $region4: #{tpu_custom_call.1} parent=1 // pred_region
      %s12 = ssub.s32 2048, 256
      %13 = vsyncadd [#allocation4], %s12
      %s14 = sshll.u32 [#allocation3], 4
      %s15 = int_to_ptr.vmem [resolvable:$true] %s14
      %20 = dma.hbm_to_vmem [thread:$0]  %s0, 256, %s15, [#allocation4], 128, 128, 8
    $region5: #{tpu_custom_call.1} parent=1 // pred_fallthru
      _
    // Predicated region
    $region6: #{tpu_custom_call.1} parent=1 // pred_check
      _
    $region7: #{tpu_custom_call.1} parent=1 // pred_check_branch
      %22 = sbr.rel (0) target = $region9
    $region8: #{tpu_custom_call.1} parent=1 // pred_region
      _
    $region9: #{tpu_custom_call.1} parent=1 // pred_fallthru
      _
    // Predicated region
    $region10: #{tpu_custom_call.1} parent=1 // pred_check
      _
    $region11: #{tpu_custom_call.1} parent=1 // pred_check_branch
      %24 = sbr.rel (0) target = $region13
    $region12: #{tpu_custom_call.1} parent=1 // pred_region
      %25 = dma.done [#allocation4], 2048
    $region13: #{tpu_custom_call.1} parent=1 // pred_fallthru
      _
    %v26 = vlaneseq
    %v27 = vshrl.u32 %v26, 7
    %v28 = vadd.s32 %v27, 8
    %v29 = vadd.s32 %v27, 16
    %v30 = vadd.s32 %v27, 24
    %v31 = vlaneseq
    %v32 = vand.u32 %v31, 127
    %vm33 = vcmp.eq.s32.totalorder %v27, %v32
    %vm34 = vcmp.eq.s32.totalorder %v28, %v32
    %vm35 = vcmp.eq.s32.totalorder %v29, %v32
    %vm36 = vcmp.eq.s32.totalorder %v30, %v32
    %v37 = vsel %vm33, 1, 0
    %v38 = vsel %vm34, 1, 0
    %v39 = vsel %vm35, 1, 0
    %v40 = vsel %vm36, 1, 0
    %v41 = vcvt.s32.f32 %v37
    %v42 = vcvt.s32.f32 %v38
    %v43 = vcvt.s32.f32 %v39
    %v44 = vcvt.s32.f32 %v40
    %v45 = vld [vmem:[#allocation3] sm:$0xff]
    %v46 = vld [vmem:[#allocation3 + $0x8] sm:$0xff]
    %v47 = vld [vmem:[#allocation3 + $0x10] sm:$0xff]
    %v48 = vld [vmem:[#allocation3 + $0x18] sm:$0xff]
    %v49 = vld [vmem:[#allocation3 + $0x20] sm:$0xff]
    %v50 = vld [vmem:[#allocation3 + $0x28] sm:$0xff]
    %v51 = vld [vmem:[#allocation3 + $0x30] sm:$0xff]
    %v52 = vld [vmem:[#allocation3 + $0x38] sm:$0xff]
    %v53 = vld [vmem:[#allocation3 + $0x40] sm:$0xff]
    %v54 = vld [vmem:[#allocation3 + $0x48] sm:$0xff]
    %v55 = vld [vmem:[#allocation3 + $0x50] sm:$0xff]
    %v56 = vld [vmem:[#allocation3 + $0x58] sm:$0xff]
    %v57 = vld [vmem:[#allocation3 + $0x60] sm:$0xff]
    %v58 = vld [vmem:[#allocation3 + $0x68] sm:$0xff]
    %v59 = vld [vmem:[#allocation3 + $0x70] sm:$0xff]
    %v60 = vld [vmem:[#allocation3 + $0x78] sm:$0xff]
    %vm61 = vcmask 261120
    %v63 = vsel %vm61, %v41, 0
    %v66 = vsel %vm61, %v42, 0
    %v69 = vsel %vm61, %v43, 0
    %v72 = vsel %vm61, %v44, 0
    %v75 = vsel %vm61, %v45, 0
    %v78 = vsel %vm61, %v46, 0
    %v81 = vsel %vm61, %v47, 0
    %v84 = vsel %vm61, %v48, 0
    %v87 = vsel %vm61, %v49, 0
    %v90 = vsel %vm61, %v50, 0
    %v93 = vsel %vm61, %v51, 0
    %v96 = vsel %vm61, %v52, 0
    %v99 = vsel %vm61, %v53, 0
    %v102 = vsel %vm61, %v54, 0
    %v105 = vsel %vm61, %v55, 0
    %v108 = vsel %vm61, %v56, 0
    %v111 = vsel %vm61, %v57, 0
    %v114 = vsel %vm61, %v58, 0
    %v117 = vsel %vm61, %v59, 0
    %v120 = vsel %vm61, %v60, 0
    %122 = vmatprep.subr.mxu0 0.0
    %v123 = vand.u32 %v75, 4294901760
    %124 = vmatpush1.xpose.msra.mxu0 %v123
    %125 = vmatprep.subr.mxu0 0.0
    %v126 = vand.u32 %v78, 4294901760
    %127 = vmatpush1.xpose.msra.mxu0 %v126
    %128 = vmatprep.subr.mxu0 0.0
    %v129 = vand.u32 %v81, 4294901760
    %130 = vmatpush1.xpose.msra.mxu0 %v129
    %131 = vmatprep.subr.mxu0 0.0
    %v132 = vand.u32 %v84, 4294901760
    %133 = vmatpush1.xpose.msra.mxu0 %v132
    %134 = vmatprep.subr.mxu0 0.0
    %v135 = vand.u32 %v87, 4294901760
    %136 = vmatpush1.xpose.msra.mxu0 %v135
    %137 = vmatprep.subr.mxu0 0.0
    %v138 = vand.u32 %v90, 4294901760
    %139 = vmatpush1.xpose.msra.mxu0 %v138
    %140 = vmatprep.subr.mxu0 0.0
    %v141 = vand.u32 %v93, 4294901760
    %142 = vmatpush1.xpose.msra.mxu0 %v141
    %143 = vmatprep.subr.mxu0 0.0
    %v144 = vand.u32 %v96, 4294901760
    %145 = vmatpush1.xpose.msra.mxu0 %v144
    %146 = vmatprep.subr.mxu0 0.0
    %v147 = vand.u32 %v99, 4294901760
    %148 = vmatpush1.xpose.msra.mxu0 %v147
    %149 = vmatprep.subr.mxu0 0.0
    %v150 = vand.u32 %v102, 4294901760
    %151 = vmatpush1.xpose.msra.mxu0 %v150
    %152 = vmatprep.subr.mxu0 0.0
    %v153 = vand.u32 %v105, 4294901760
    %154 = vmatpush1.xpose.msra.mxu0 %v153
    %155 = vmatprep.subr.mxu0 0.0
    %v156 = vand.u32 %v108, 4294901760
    %157 = vmatpush1.xpose.msra.mxu0 %v156
    %158 = vmatprep.subr.mxu0 0.0
    %v159 = vand.u32 %v111, 4294901760
    %160 = vmatpush1.xpose.msra.mxu0 %v159
    %161 = vmatprep.subr.mxu0 0.0
    %v162 = vand.u32 %v114, 4294901760
    %163 = vmatpush1.xpose.msra.mxu0 %v162
    %164 = vmatprep.subr.mxu0 0.0
    %v165 = vand.u32 %v117, 4294901760
    %166 = vmatpush1.xpose.msra.mxu0 %v165
    %167 = vmatprep.subr.mxu0 0.0
    %v168 = vand.u32 %v120, 4294901760
    %169 = vmatpush1.xpose.msra.mxu0 %v168
    %170 = vmatprep.subr.mxu0 0.0
    %171 = vmatpush1.xpose.msra.mxu0 0.0
    %172 = vmatprep.subr.mxu0 0.0
    %173 = vmatpush1.xpose.msra.mxu0 0.0
    %174 = vmatprep.subr.mxu0 0.0
    %175 = vmatpush1.xpose.msra.mxu0 0.0
    %176 = vmatprep.subr.mxu0 0.0
    %177 = vmatpush1.xpose.msra.mxu0 0.0
    %178 = vmatprep.subr.mxu0 0.0
    %179 = vmatpush1.xpose.msra.mxu0 0.0
    %180 = vmatprep.subr.mxu0 0.0
    %181 = vmatpush1.xpose.msra.mxu0 0.0
    %182 = vmatprep.subr.mxu0 0.0
    %183 = vmatpush1.xpose.msra.mxu0 0.0
    %184 = vmatprep.subr.mxu0 0.0
    %185 = vmatpush1.xpose.msra.mxu0 0.0
    %186 = vmatprep.subr.mxu0 0.0
    %187 = vmatpush1.xpose.msra.mxu0 0.0
    %188 = vmatprep.subr.mxu0 0.0
    %189 = vmatpush1.xpose.msra.mxu0 0.0
    %190 = vmatprep.subr.mxu0 0.0
    %191 = vmatpush1.xpose.msra.mxu0 0.0
    %192 = vmatprep.subr.mxu0 0.0
    %193 = vmatpush1.xpose.msra.mxu0 0.0
    %194 = vmatprep.subr.mxu0 0.0
    %195 = vmatpush1.xpose.msra.mxu0 0.0
    %196 = vmatprep.subr.mxu0 0.0
    %197 = vmatpush1.xpose.msra.mxu0 0.0
    %198 = vmatprep.subr.mxu0 0.0
    %199 = vmatpush1.xpose.msra.mxu0 0.0
    %200 = vmatprep.subr.mxu0 0.0
    %201 = vmatpush1.xpose.msra.mxu0 0.0
    %202 = vmatprep.mubr.f32.mxu0 0.0
    %v203 = vand.u32 %v63, 4294901760
    %v204 = vsub.f32 %v63, %v203
    %v205 = vand.u32 %v204, 4294901760
    %v206 = vsub.f32 %v204, %v205
    %v207 = vand.u32 %v206, 4294901760
    %208 = vmatmul.mubr.f32.gmra.mrb[0].mxu0 %v207
    %v209 = vpop.f32.mrb[0].mxu0
    %v210 = vadd.f32 0.0, %v209
    %v211 = vpop.f32.mrb[0].mxu0
    %212 = vmatprep.mubr.f32.mxu0 0.0
    %v213 = vand.u32 %v66, 4294901760
    %v214 = vsub.f32 %v66, %v213
    %v215 = vand.u32 %v214, 4294901760
    %v216 = vsub.f32 %v214, %v215
    %v217 = vand.u32 %v216, 4294901760
    %218 = vmatmul.mubr.f32.gmra.mrb[0].mxu0 %v217
    %v219 = vpop.f32.mrb[0].mxu0
    %v220 = vadd.f32 0.0, %v219
    %v221 = vpop.f32.mrb[0].mxu0
    %222 = vmatprep.mubr.f32.mxu0 0.0
    %v223 = vand.u32 %v69, 4294901760
    %v224 = vsub.f32 %v69, %v223
    %v225 = vand.u32 %v224, 4294901760
    %v226 = vsub.f32 %v224, %v225
    %v227 = vand.u32 %v226, 4294901760
    %228 = vmatmul.mubr.f32.gmra.mrb[0].mxu0 %v227
    %v229 = vpop.f32.mrb[0].mxu0
    %v230 = vadd.f32 0.0, %v229
    %v231 = vpop.f32.mrb[0].mxu0
    %232 = vmatprep.mubr.f32.mxu0 0.0
    %v233 = vand.u32 %v72, 4294901760
    %v234 = vsub.f32 %v72, %v233
    %v235 = vand.u32 %v234, 4294901760
    %v236 = vsub.f32 %v234, %v235
    %v237 = vand.u32 %v236, 4294901760
    %238 = vmatmul.mubr.f32.gmra.mrb[0].mxu0 %v237
    %v239 = vpop.f32.mrb[0].mxu0
    %v240 = vadd.f32 0.0, %v239
    %v241 = vpop.f32.mrb[0].mxu0
    %242 = vdwg.mxu0
    %243 = vmatprep.subr.mxu0 0.0
    %v244 = vand.u32 %v75, 4294901760
    %v245 = vsub.f32 %v75, %v244
    %v246 = vand.u32 %v245, 4294901760
    %v247 = vsub.f32 %v245, %v246
    %v248 = vand.u32 %v247, 4294901760
    %249 = vmatpush1.xpose.msra.mxu0 %v248
    %250 = vmatprep.subr.mxu0 0.0
    %v251 = vand.u32 %v78, 4294901760
    %v252 = vsub.f32 %v78, %v251
    %v253 = vand.u32 %v252, 4294901760
    %v254 = vsub.f32 %v252, %v253
    %v255 = vand.u32 %v254, 4294901760
    %256 = vmatpush1.xpose.msra.mxu0 %v255
    %257 = vmatprep.subr.mxu0 0.0
    %v258 = vand.u32 %v81, 4294901760
    %v259 = vsub.f32 %v81, %v258
    %v260 = vand.u32 %v259, 4294901760
    %v261 = vsub.f32 %v259, %v260
    %v262 = vand.u32 %v261, 4294901760
    %263 = vmatpush1.xpose.msra.mxu0 %v262
    %264 = vmatprep.subr.mxu0 0.0
    %v265 = vand.u32 %v84, 4294901760
    %v266 = vsub.f32 %v84, %v265
    %v267 = vand.u32 %v266, 4294901760
    %v268 = vsub.f32 %v266, %v267
    %v269 = vand.u32 %v268, 4294901760
    %270 = vmatpush1.xpose.msra.mxu0 %v269
    %271 = vmatprep.subr.mxu0 0.0
    %v272 = vand.u32 %v87, 4294901760
    %v273 = vsub.f32 %v87, %v272
    %v274 = vand.u32 %v273, 4294901760
    %v275 = vsub.f32 %v273, %v274
    %v276 = vand.u32 %v275, 4294901760
    %277 = vmatpush1.xpose.msra.mxu0 %v276
    %278 = vmatprep.subr.mxu0 0.0
    %v279 = vand.u32 %v90, 4294901760
    %v280 = vsub.f32 %v90, %v279
    %v281 = vand.u32 %v280, 4294901760
    %v282 = vsub.f32 %v280, %v281
    %v283 = vand.u32 %v282, 4294901760
    %284 = vmatpush1.xpose.msra.mxu0 %v283
    %285 = vmatprep.subr.mxu0 0.0
    %v286 = vand.u32 %v93, 4294901760
    %v287 = vsub.f32 %v93, %v286
    %v288 = vand.u32 %v287, 4294901760
    %v289 = vsub.f32 %v287, %v288
    %v290 = vand.u32 %v289, 4294901760
    %291 = vmatpush1.xpose.msra.mxu0 %v290
    %292 = vmatprep.subr.mxu0 0.0
    %v293 = vand.u32 %v96, 4294901760
    %v294 = vsub.f32 %v96, %v293
    %v295 = vand.u32 %v294, 4294901760
    %v296 = vsub.f32 %v294, %v295
    %v297 = vand.u32 %v296, 4294901760
    %298 = vmatpush1.xpose.msra.mxu0 %v297
    %299 = vmatprep.subr.mxu0 0.0
    %v300 = vand.u32 %v99, 4294901760
    %v301 = vsub.f32 %v99, %v300
    %v302 = vand.u32 %v301, 4294901760
    %v303 = vsub.f32 %v301, %v302
    %v304 = vand.u32 %v303, 4294901760
    %305 = vmatpush1.xpose.msra.mxu0 %v304
    %306 = vmatprep.subr.mxu0 0.0
    %v307 = vand.u32 %v102, 4294901760
    %v308 = vsub.f32 %v102, %v307
    %v309 = vand.u32 %v308, 4294901760
    %v310 = vsub.f32 %v308, %v309
    %v311 = vand.u32 %v310, 4294901760
    %312 = vmatpush1.xpose.msra.mxu0 %v311
    %313 = vmatprep.subr.mxu0 0.0
    %v314 = vand.u32 %v105, 4294901760
    %v315 = vsub.f32 %v105, %v314
    %v316 = vand.u32 %v315, 4294901760
    %v317 = vsub.f32 %v315, %v316
    %v318 = vand.u32 %v317, 4294901760
    %319 = vmatpush1.xpose.msra.mxu0 %v318
    %320 = vmatprep.subr.mxu0 0.0
    %v321 = vand.u32 %v108, 4294901760
    %v322 = vsub.f32 %v108, %v321
    %v323 = vand.u32 %v322, 4294901760
    %v324 = vsub.f32 %v322, %v323
    %v325 = vand.u32 %v324, 4294901760
    %326 = vmatpush1.xpose.msra.mxu0 %v325
    %327 = vmatprep.subr.mxu0 0.0
    %v328 = vand.u32 %v111, 4294901760
    %v329 = vsub.f32 %v111, %v328
    %v330 = vand.u32 %v329, 4294901760
    %v331 = vsub.f32 %v329, %v330
    %v332 = vand.u32 %v331, 4294901760
    %333 = vmatpush1.xpose.msra.mxu0 %v332
    %334 = vmatprep.subr.mxu0 0.0
    %v335 = vand.u32 %v114, 4294901760
    %v336 = vsub.f32 %v114, %v335
    %v337 = vand.u32 %v336, 4294901760
    %v338 = vsub.f32 %v336, %v337
    %v339 = vand.u32 %v338, 4294901760
    %340 = vmatpush1.xpose.msra.mxu0 %v339
    %341 = vmatprep.subr.mxu0 0.0
    %v342 = vand.u32 %v117, 4294901760
    %v343 = vsub.f32 %v117, %v342
    %v344 = vand.u32 %v343, 4294901760
    %v345 = vsub.f32 %v343, %v344
    %v346 = vand.u32 %v345, 4294901760
    %347 = vmatpush1.xpose.msra.mxu0 %v346
    %348 = vmatprep.subr.mxu0 0.0
    %v349 = vand.u32 %v120, 4294901760
    %v350 = vsub.f32 %v120, %v349
    %v351 = vand.u32 %v350, 4294901760
    %v352 = vsub.f32 %v350, %v351
    %v353 = vand.u32 %v352, 4294901760
    %354 = vmatpush1.xpose.msra.mxu0 %v353
    %355 = vmatprep.subr.mxu0 0.0
    %356 = vmatpush1.xpose.msra.mxu0 0.0
    %357 = vmatprep.subr.mxu0 0.0
    %358 = vmatpush1.xpose.msra.mxu0 0.0
    %359 = vmatprep.subr.mxu0 0.0
    %360 = vmatpush1.xpose.msra.mxu0 0.0
    %361 = vmatprep.subr.mxu0 0.0
    %362 = vmatpush1.xpose.msra.mxu0 0.0
    %363 = vmatprep.subr.mxu0 0.0
    %364 = vmatpush1.xpose.msra.mxu0 0.0
    %365 = vmatprep.subr.mxu0 0.0
    %366 = vmatpush1.xpose.msra.mxu0 0.0
    %367 = vmatprep.subr.mxu0 0.0
    %368 = vmatpush1.xpose.msra.mxu0 0.0
    %369 = vmatprep.subr.mxu0 0.0
    %370 = vmatpush1.xpose.msra.mxu0 0.0
    %371 = vmatprep.subr.mxu0 0.0
    %372 = vmatpush1.xpose.msra.mxu0 0.0
    %373 = vmatprep.subr.mxu0 0.0
    %374 = vmatpush1.xpose.msra.mxu0 0.0
    %375 = vmatprep.subr.mxu0 0.0
    %376 = vmatpush1.xpose.msra.mxu0 0.0
    %377 = vmatprep.subr.mxu0 0.0
    %378 = vmatpush1.xpose.msra.mxu0 0.0
    %379 = vmatprep.subr.mxu0 0.0
    %380 = vmatpush1.xpose.msra.mxu0 0.0
    %381 = vmatprep.subr.mxu0 0.0
    %382 = vmatpush1.xpose.msra.mxu0 0.0
    %383 = vmatprep.subr.mxu0 0.0
    %384 = vmatpush1.xpose.msra.mxu0 0.0
    %385 = vmatprep.subr.mxu0 0.0
    %386 = vmatpush1.xpose.msra.mxu0 0.0
    %387 = vmatprep.mubr.f32.mxu0 0.0
    %v388 = vand.u32 %v63, 4294901760
    %389 = vmatmul.mubr.f32.gmra.mrb[0].mxu0 %v388
    %v390 = vpop.f32.mrb[0].mxu0
    %v391 = vadd.f32 %v210, %v390
    %v392 = vpop.f32.mrb[0].mxu0
    %393 = vmatprep.mubr.f32.mxu0 0.0
    %v394 = vand.u32 %v66, 4294901760
    %395 = vmatmul.mubr.f32.gmra.mrb[0].mxu0 %v394
    %v396 = vpop.f32.mrb[0].mxu0
    %v397 = vadd.f32 %v220, %v396
    %v398 = vpop.f32.mrb[0].mxu0
    %399 = vmatprep.mubr.f32.mxu0 0.0
    %v400 = vand.u32 %v69, 4294901760
    %401 = vmatmul.mubr.f32.gmra.mrb[0].mxu0 %v400
    %v402 = vpop.f32.mrb[0].mxu0
    %v403 = vadd.f32 %v230, %v402
    %v404 = vpop.f32.mrb[0].mxu0
    %405 = vmatprep.mubr.f32.mxu0 0.0
    %v406 = vand.u32 %v72, 4294901760
    %407 = vmatmul.mubr.f32.gmra.mrb[0].mxu0 %v406
    %v408 = vpop.f32.mrb[0].mxu0
    %v409 = vadd.f32 %v240, %v408
    %v410 = vpop.f32.mrb[0].mxu0
    %411 = vdwg.mxu0
    %412 = vmatprep.subr.mxu0 0.0
    %v413 = vand.u32 %v75, 4294901760
    %v414 = vsub.f32 %v75, %v413
    %415 = vmatpush1.xpose.msra.mxu0 %v414
    %416 = vmatprep.subr.mxu0 0.0
    %v417 = vand.u32 %v78, 4294901760
    %v418 = vsub.f32 %v78, %v417
    %419 = vmatpush1.xpose.msra.mxu0 %v418
    %420 = vmatprep.subr.mxu0 0.0
    %v421 = vand.u32 %v81, 4294901760
    %v422 = vsub.f32 %v81, %v421
    %423 = vmatpush1.xpose.msra.mxu0 %v422
    %424 = vmatprep.subr.mxu0 0.0
    %v425 = vand.u32 %v84, 4294901760
    %v426 = vsub.f32 %v84, %v425
    %427 = vmatpush1.xpose.msra.mxu0 %v426
    %428 = vmatprep.subr.mxu0 0.0
    %v429 = vand.u32 %v87, 4294901760
    %v430 = vsub.f32 %v87, %v429
    %431 = vmatpush1.xpose.msra.mxu0 %v430
    %432 = vmatprep.subr.mxu0 0.0
    %v433 = vand.u32 %v90, 4294901760
    %v434 = vsub.f32 %v90, %v433
    %435 = vmatpush1.xpose.msra.mxu0 %v434
    %436 = vmatprep.subr.mxu0 0.0
    %v437 = vand.u32 %v93, 4294901760
    %v438 = vsub.f32 %v93, %v437
    %439 = vmatpush1.xpose.msra.mxu0 %v438
    %440 = vmatprep.subr.mxu0 0.0
    %v441 = vand.u32 %v96, 4294901760
    %v442 = vsub.f32 %v96, %v441
    %443 = vmatpush1.xpose.msra.mxu0 %v442
    %444 = vmatprep.subr.mxu0 0.0
    %v445 = vand.u32 %v99, 4294901760
    %v446 = vsub.f32 %v99, %v445
    %447 = vmatpush1.xpose.msra.mxu0 %v446
    %448 = vmatprep.subr.mxu0 0.0
    %v449 = vand.u32 %v102, 4294901760
    %v450 = vsub.f32 %v102, %v449
    %451 = vmatpush1.xpose.msra.mxu0 %v450
    %452 = vmatprep.subr.mxu0 0.0
    %v453 = vand.u32 %v105, 4294901760
    %v454 = vsub.f32 %v105, %v453
    %455 = vmatpush1.xpose.msra.mxu0 %v454
    %456 = vmatprep.subr.mxu0 0.0
    %v457 = vand.u32 %v108, 4294901760
    %v458 = vsub.f32 %v108, %v457
    %459 = vmatpush1.xpose.msra.mxu0 %v458
    %460 = vmatprep.subr.mxu0 0.0
    %v461 = vand.u32 %v111, 4294901760
    %v462 = vsub.f32 %v111, %v461
    %463 = vmatpush1.xpose.msra.mxu0 %v462
    %464 = vmatprep.subr.mxu0 0.0
    %v465 = vand.u32 %v114, 4294901760
    %v466 = vsub.f32 %v114, %v465
    %467 = vmatpush1.xpose.msra.mxu0 %v466
    %468 = vmatprep.subr.mxu0 0.0
    %v469 = vand.u32 %v117, 4294901760
    %v470 = vsub.f32 %v117, %v469
    %471 = vmatpush1.xpose.msra.mxu0 %v470
    %472 = vmatprep.subr.mxu0 0.0
    %v473 = vand.u32 %v120, 4294901760
    %v474 = vsub.f32 %v120, %v473
    %475 = vmatpush1.xpose.msra.mxu0 %v474
    %476 = vmatprep.subr.mxu0 0.0
    %477 = vmatpush1.xpose.msra.mxu0 0.0
    %478 = vmatprep.subr.mxu0 0.0
    %479 = vmatpush1.xpose.msra.mxu0 0.0
    %480 = vmatprep.subr.mxu0 0.0
    %481 = vmatpush1.xpose.msra.mxu0 0.0
    %482 = vmatprep.subr.mxu0 0.0
    %483 = vmatpush1.xpose.msra.mxu0 0.0
    %484 = vmatprep.subr.mxu0 0.0
    %485 = vmatpush1.xpose.msra.mxu0 0.0
    %486 = vmatprep.subr.mxu0 0.0
    %487 = vmatpush1.xpose.msra.mxu0 0.0
    %488 = vmatprep.subr.mxu0 0.0
    %489 = vmatpush1.xpose.msra.mxu0 0.0
    %490 = vmatprep.subr.mxu0 0.0
    %491 = vmatpush1.xpose.msra.mxu0 0.0
    %492 = vmatprep.subr.mxu0 0.0
    %493 = vmatpush1.xpose.msra.mxu0 0.0
    %494 = vmatprep.subr.mxu0 0.0
    %495 = vmatpush1.xpose.msra.mxu0 0.0
    %496 = vmatprep.subr.mxu0 0.0
    %497 = vmatpush1.xpose.msra.mxu0 0.0
    %498 = vmatprep.subr.mxu0 0.0
    %499 = vmatpush1.xpose.msra.mxu0 0.0
    %500 = vmatprep.subr.mxu0 0.0
    %501 = vmatpush1.xpose.msra.mxu0 0.0
    %502 = vmatprep.subr.mxu0 0.0
    %503 = vmatpush1.xpose.msra.mxu0 0.0
    %504 = vmatprep.subr.mxu0 0.0
    %505 = vmatpush1.xpose.msra.mxu0 0.0
    %506 = vmatprep.subr.mxu0 0.0
    %507 = vmatpush1.xpose.msra.mxu0 0.0
    %508 = vmatprep.mubr.f32.mxu0 0.0
    %v509 = vand.u32 %v63, 4294901760
    %v510 = vsub.f32 %v63, %v509
    %511 = vmatmul.mubr.f32.gmra.mrb[0].mxu0 %v510
    %v512 = vpop.f32.mrb[0].mxu0
    %v513 = vadd.f32 %v391, %v512
    %v514 = vpop.f32.mrb[0].mxu0
    %515 = vmatprep.mubr.f32.mxu0 0.0
    %v516 = vand.u32 %v66, 4294901760
    %v517 = vsub.f32 %v66, %v516
    %518 = vmatmul.mubr.f32.gmra.mrb[0].mxu0 %v517
    %v519 = vpop.f32.mrb[0].mxu0
    %v520 = vadd.f32 %v397, %v519
    %v521 = vpop.f32.mrb[0].mxu0
    %522 = vmatprep.mubr.f32.mxu0 0.0
    %v523 = vand.u32 %v69, 4294901760
    %v524 = vsub.f32 %v69, %v523
    %525 = vmatmul.mubr.f32.gmra.mrb[0].mxu0 %v524
    %v526 = vpop.f32.mrb[0].mxu0
    %v527 = vadd.f32 %v403, %v526
    %v528 = vpop.f32.mrb[0].mxu0
    %529 = vmatprep.mubr.f32.mxu0 0.0
    %v530 = vand.u32 %v72, 4294901760
    %v531 = vsub.f32 %v72, %v530
    %532 = vmatmul.mubr.f32.gmra.mrb[0].mxu0 %v531
    %v533 = vpop.f32.mrb[0].mxu0
    %v534 = vadd.f32 %v409, %v533
    %v535 = vpop.f32.mrb[0].mxu0
    %536 = vdwg.mxu0
    %537 = vmatprep.subr.mxu0 0.0
    %v538 = vand.u32 %v75, 4294901760
    %539 = vmatpush1.xpose.msra.mxu0 %v538
    %540 = vmatprep.subr.mxu0 0.0
    %v541 = vand.u32 %v78, 4294901760
    %542 = vmatpush1.xpose.msra.mxu0 %v541
    %543 = vmatprep.subr.mxu0 0.0
    %v544 = vand.u32 %v81, 4294901760
    %545 = vmatpush1.xpose.msra.mxu0 %v544
    %546 = vmatprep.subr.mxu0 0.0
    %v547 = vand.u32 %v84, 4294901760
    %548 = vmatpush1.xpose.msra.mxu0 %v547
    %549 = vmatprep.subr.mxu0 0.0
    %v550 = vand.u32 %v87, 4294901760
    %551 = vmatpush1.xpose.msra.mxu0 %v550
    %552 = vmatprep.subr.mxu0 0.0
    %v553 = vand.u32 %v90, 4294901760
    %554 = vmatpush1.xpose.msra.mxu0 %v553
    %555 = vmatprep.subr.mxu0 0.0
    %v556 = vand.u32 %v93, 4294901760
    %557 = vmatpush1.xpose.msra.mxu0 %v556
    %558 = vmatprep.subr.mxu0 0.0
    %v559 = vand.u32 %v96, 4294901760
    %560 = vmatpush1.xpose.msra.mxu0 %v559
    %561 = vmatprep.subr.mxu0 0.0
    %v562 = vand.u32 %v99, 4294901760
    %563 = vmatpush1.xpose.msra.mxu0 %v562
    %564 = vmatprep.subr.mxu0 0.0
    %v565 = vand.u32 %v102, 4294901760
    %566 = vmatpush1.xpose.msra.mxu0 %v565
    %567 = vmatprep.subr.mxu0 0.0
    %v568 = vand.u32 %v105, 4294901760
    %569 = vmatpush1.xpose.msra.mxu0 %v568
    %570 = vmatprep.subr.mxu0 0.0
    %v571 = vand.u32 %v108, 4294901760
    %572 = vmatpush1.xpose.msra.mxu0 %v571
    %573 = vmatprep.subr.mxu0 0.0
    %v574 = vand.u32 %v111, 4294901760
    %575 = vmatpush1.xpose.msra.mxu0 %v574
    %576 = vmatprep.subr.mxu0 0.0
    %v577 = vand.u32 %v114, 4294901760
    %578 = vmatpush1.xpose.msra.mxu0 %v577
    %579 = vmatprep.subr.mxu0 0.0
    %v580 = vand.u32 %v117, 4294901760
    %581 = vmatpush1.xpose.msra.mxu0 %v580
    %582 = vmatprep.subr.mxu0 0.0
    %v583 = vand.u32 %v120, 4294901760
    %584 = vmatpush1.xpose.msra.mxu0 %v583
    %585 = vmatprep.subr.mxu0 0.0
    %586 = vmatpush1.xpose.msra.mxu0 0.0
    %587 = vmatprep.subr.mxu0 0.0
    %588 = vmatpush1.xpose.msra.mxu0 0.0
    %589 = vmatprep.subr.mxu0 0.0
    %590 = vmatpush1.xpose.msra.mxu0 0.0
    %591 = vmatprep.subr.mxu0 0.0
    %592 = vmatpush1.xpose.msra.mxu0 0.0
    %593 = vmatprep.subr.mxu0 0.0
    %594 = vmatpush1.xpose.msra.mxu0 0.0
    %595 = vmatprep.subr.mxu0 0.0
    %596 = vmatpush1.xpose.msra.mxu0 0.0
    %597 = vmatprep.subr.mxu0 0.0
    %598 = vmatpush1.xpose.msra.mxu0 0.0
    %599 = vmatprep.subr.mxu0 0.0
    %600 = vmatpush1.xpose.msra.mxu0 0.0
    %601 = vmatprep.subr.mxu0 0.0
    %602 = vmatpush1.xpose.msra.mxu0 0.0
    %603 = vmatprep.subr.mxu0 0.0
    %604 = vmatpush1.xpose.msra.mxu0 0.0
    %605 = vmatprep.subr.mxu0 0.0
    %606 = vmatpush1.xpose.msra.mxu0 0.0
    %607 = vmatprep.subr.mxu0 0.0
    %608 = vmatpush1.xpose.msra.mxu0 0.0
    %609 = vmatprep.subr.mxu0 0.0
    %610 = vmatpush1.xpose.msra.mxu0 0.0
    %611 = vmatprep.subr.mxu0 0.0
    %612 = vmatpush1.xpose.msra.mxu0 0.0
    %613 = vmatprep.subr.mxu0 0.0
    %614 = vmatpush1.xpose.msra.mxu0 0.0
    %615 = vmatprep.subr.mxu0 0.0
    %616 = vmatpush1.xpose.msra.mxu0 0.0
    %617 = vmatprep.mubr.f32.mxu0 0.0
    %v618 = vand.u32 %v63, 4294901760
    %v619 = vsub.f32 %v63, %v618
    %v620 = vand.u32 %v619, 4294901760
    %621 = vmatmul.mubr.f32.gmra.mrb[0].mxu0 %v620
    %v622 = vpop.f32.mrb[0].mxu0
    %v623 = vadd.f32 %v513, %v622
    %v624 = vpop.f32.mrb[0].mxu0
    %625 = vmatprep.mubr.f32.mxu0 0.0
    %v626 = vand.u32 %v66, 4294901760
    %v627 = vsub.f32 %v66, %v626
    %v628 = vand.u32 %v627, 4294901760
    %629 = vmatmul.mubr.f32.gmra.mrb[0].mxu0 %v628
    %v630 = vpop.f32.mrb[0].mxu0
    %v631 = vadd.f32 %v520, %v630
    %v632 = vpop.f32.mrb[0].mxu0
    %633 = vmatprep.mubr.f32.mxu0 0.0
    %v634 = vand.u32 %v69, 4294901760
    %v635 = vsub.f32 %v69, %v634
    %v636 = vand.u32 %v635, 4294901760
    %637 = vmatmul.mubr.f32.gmra.mrb[0].mxu0 %v636
    %v638 = vpop.f32.mrb[0].mxu0
    %v639 = vadd.f32 %v527, %v638
    %v640 = vpop.f32.mrb[0].mxu0
    %641 = vmatprep.mubr.f32.mxu0 0.0
    %v642 = vand.u32 %v72, 4294901760
    %v643 = vsub.f32 %v72, %v642
    %v644 = vand.u32 %v643, 4294901760
    %645 = vmatmul.mubr.f32.gmra.mrb[0].mxu0 %v644
    %v646 = vpop.f32.mrb[0].mxu0
    %v647 = vadd.f32 %v534, %v646
    %v648 = vpop.f32.mrb[0].mxu0
    %649 = vdwg.mxu0
    %650 = vmatprep.subr.mxu0 0.0
    %v651 = vand.u32 %v75, 4294901760
    %v652 = vsub.f32 %v75, %v651
    %v653 = vand.u32 %v652, 4294901760
    %654 = vmatpush1.xpose.msra.mxu0 %v653
    %655 = vmatprep.subr.mxu0 0.0
    %v656 = vand.u32 %v78, 4294901760
    %v657 = vsub.f32 %v78, %v656
    %v658 = vand.u32 %v657, 4294901760
    %659 = vmatpush1.xpose.msra.mxu0 %v658
    %660 = vmatprep.subr.mxu0 0.0
    %v661 = vand.u32 %v81, 4294901760
    %v662 = vsub.f32 %v81, %v661
    %v663 = vand.u32 %v662, 4294901760
    %664 = vmatpush1.xpose.msra.mxu0 %v663
    %665 = vmatprep.subr.mxu0 0.0
    %v666 = vand.u32 %v84, 4294901760
    %v667 = vsub.f32 %v84, %v666
    %v668 = vand.u32 %v667, 4294901760
    %669 = vmatpush1.xpose.msra.mxu0 %v668
    %670 = vmatprep.subr.mxu0 0.0
    %v671 = vand.u32 %v87, 4294901760
    %v672 = vsub.f32 %v87, %v671
    %v673 = vand.u32 %v672, 4294901760
    %674 = vmatpush1.xpose.msra.mxu0 %v673
    %675 = vmatprep.subr.mxu0 0.0
    %v676 = vand.u32 %v90, 4294901760
    %v677 = vsub.f32 %v90, %v676
    %v678 = vand.u32 %v677, 4294901760
    %679 = vmatpush1.xpose.msra.mxu0 %v678
    %680 = vmatprep.subr.mxu0 0.0
    %v681 = vand.u32 %v93, 4294901760
    %v682 = vsub.f32 %v93, %v681
    %v683 = vand.u32 %v682, 4294901760
    %684 = vmatpush1.xpose.msra.mxu0 %v683
    %685 = vmatprep.subr.mxu0 0.0
    %v686 = vand.u32 %v96, 4294901760
    %v687 = vsub.f32 %v96, %v686
    %v688 = vand.u32 %v687, 4294901760
    %689 = vmatpush1.xpose.msra.mxu0 %v688
    %690 = vmatprep.subr.mxu0 0.0
    %v691 = vand.u32 %v99, 4294901760
    %v692 = vsub.f32 %v99, %v691
    %v693 = vand.u32 %v692, 4294901760
    %694 = vmatpush1.xpose.msra.mxu0 %v693
    %695 = vmatprep.subr.mxu0 0.0
    %v696 = vand.u32 %v102, 4294901760
    %v697 = vsub.f32 %v102, %v696
    %v698 = vand.u32 %v697, 4294901760
    %699 = vmatpush1.xpose.msra.mxu0 %v698
    %700 = vmatprep.subr.mxu0 0.0
    %v701 = vand.u32 %v105, 4294901760
    %v702 = vsub.f32 %v105, %v701
    %v703 = vand.u32 %v702, 4294901760
    %704 = vmatpush1.xpose.msra.mxu0 %v703
    %705 = vmatprep.subr.mxu0 0.0
    %v706 = vand.u32 %v108, 4294901760
    %v707 = vsub.f32 %v108, %v706
    %v708 = vand.u32 %v707, 4294901760
    %709 = vmatpush1.xpose.msra.mxu0 %v708
    %710 = vmatprep.subr.mxu0 0.0
    %v711 = vand.u32 %v111, 4294901760
    %v712 = vsub.f32 %v111, %v711
    %v713 = vand.u32 %v712, 4294901760
    %714 = vmatpush1.xpose.msra.mxu0 %v713
    %715 = vmatprep.subr.mxu0 0.0
    %v716 = vand.u32 %v114, 4294901760
    %v717 = vsub.f32 %v114, %v716
    %v718 = vand.u32 %v717, 4294901760
    %719 = vmatpush1.xpose.msra.mxu0 %v718
    %720 = vmatprep.subr.mxu0 0.0
    %v721 = vand.u32 %v117, 4294901760
    %v722 = vsub.f32 %v117, %v721
    %v723 = vand.u32 %v722, 4294901760
    %724 = vmatpush1.xpose.msra.mxu0 %v723
    %725 = vmatprep.subr.mxu0 0.0
    %v726 = vand.u32 %v120, 4294901760
    %v727 = vsub.f32 %v120, %v726
    %v728 = vand.u32 %v727, 4294901760
    %729 = vmatpush1.xpose.msra.mxu0 %v728
    %730 = vmatprep.subr.mxu0 0.0
    %731 = vmatpush1.xpose.msra.mxu0 0.0
    %732 = vmatprep.subr.mxu0 0.0
    %733 = vmatpush1.xpose.msra.mxu0 0.0
    %734 = vmatprep.subr.mxu0 0.0
    %735 = vmatpush1.xpose.msra.mxu0 0.0
    %736 = vmatprep.subr.mxu0 0.0
    %737 = vmatpush1.xpose.msra.mxu0 0.0
    %738 = vmatprep.subr.mxu0 0.0
    %739 = vmatpush1.xpose.msra.mxu0 0.0
    %740 = vmatprep.subr.mxu0 0.0
    %741 = vmatpush1.xpose.msra.mxu0 0.0
    %742 = vmatprep.subr.mxu0 0.0
    %743 = vmatpush1.xpose.msra.mxu0 0.0
    %744 = vmatprep.subr.mxu0 0.0
    %745 = vmatpush1.xpose.msra.mxu0 0.0
    %746 = vmatprep.subr.mxu0 0.0
    %747 = vmatpush1.xpose.msra.mxu0 0.0
    %748 = vmatprep.subr.mxu0 0.0
    %749 = vmatpush1.xpose.msra.mxu0 0.0
    %750 = vmatprep.subr.mxu0 0.0
    %751 = vmatpush1.xpose.msra.mxu0 0.0
    %752 = vmatprep.subr.mxu0 0.0
    %753 = vmatpush1.xpose.msra.mxu0 0.0
    %754 = vmatprep.subr.mxu0 0.0
    %755 = vmatpush1.xpose.msra.mxu0 0.0
    %756 = vmatprep.subr.mxu0 0.0
    %757 = vmatpush1.xpose.msra.mxu0 0.0
    %758 = vmatprep.subr.mxu0 0.0
    %759 = vmatpush1.xpose.msra.mxu0 0.0
    %760 = vmatprep.subr.mxu0 0.0
    %761 = vmatpush1.xpose.msra.mxu0 0.0
    %762 = vmatprep.mubr.f32.mxu0 0.0
    %v763 = vand.u32 %v63, 4294901760
    %764 = vmatmul.mubr.f32.gmra.mrb[0].mxu0 %v763
    %v765 = vpop.f32.mrb[0].mxu0
    %v766 = vadd.f32 %v623, %v765
    %v767 = vpop.f32.mrb[0].mxu0
    %768 = vmatprep.mubr.f32.mxu0 0.0
    %v769 = vand.u32 %v66, 4294901760
    %770 = vmatmul.mubr.f32.gmra.mrb[0].mxu0 %v769
    %v771 = vpop.f32.mrb[0].mxu0
    %v772 = vadd.f32 %v631, %v771
    %v773 = vpop.f32.mrb[0].mxu0
    %774 = vmatprep.mubr.f32.mxu0 0.0
    %v775 = vand.u32 %v69, 4294901760
    %776 = vmatmul.mubr.f32.gmra.mrb[0].mxu0 %v775
    %v777 = vpop.f32.mrb[0].mxu0
    %v778 = vadd.f32 %v639, %v777
    %v779 = vpop.f32.mrb[0].mxu0
    %780 = vmatprep.mubr.f32.mxu0 0.0
    %v781 = vand.u32 %v72, 4294901760
    %782 = vmatmul.mubr.f32.gmra.mrb[0].mxu0 %v781
    %v783 = vpop.f32.mrb[0].mxu0
    %v784 = vadd.f32 %v647, %v783
    %v785 = vpop.f32.mrb[0].mxu0
    %786 = vdwg.mxu0
    %787 = vmatprep.subr.mxu0 0.0
    %v788 = vand.u32 %v75, 4294901760
    %789 = vmatpush1.xpose.msra.mxu0 %v788
    %790 = vmatprep.subr.mxu0 0.0
    %v791 = vand.u32 %v78, 4294901760
    %792 = vmatpush1.xpose.msra.mxu0 %v791
    %793 = vmatprep.subr.mxu0 0.0
    %v794 = vand.u32 %v81, 4294901760
    %795 = vmatpush1.xpose.msra.mxu0 %v794
    %796 = vmatprep.subr.mxu0 0.0
    %v797 = vand.u32 %v84, 4294901760
    %798 = vmatpush1.xpose.msra.mxu0 %v797
    %799 = vmatprep.subr.mxu0 0.0
    %v800 = vand.u32 %v87, 4294901760
    %801 = vmatpush1.xpose.msra.mxu0 %v800
    %802 = vmatprep.subr.mxu0 0.0
    %v803 = vand.u32 %v90, 4294901760
    %804 = vmatpush1.xpose.msra.mxu0 %v803
    %805 = vmatprep.subr.mxu0 0.0
    %v806 = vand.u32 %v93, 4294901760
    %807 = vmatpush1.xpose.msra.mxu0 %v806
    %808 = vmatprep.subr.mxu0 0.0
    %v809 = vand.u32 %v96, 4294901760
    %810 = vmatpush1.xpose.msra.mxu0 %v809
    %811 = vmatprep.subr.mxu0 0.0
    %v812 = vand.u32 %v99, 4294901760
    %813 = vmatpush1.xpose.msra.mxu0 %v812
    %814 = vmatprep.subr.mxu0 0.0
    %v815 = vand.u32 %v102, 4294901760
    %816 = vmatpush1.xpose.msra.mxu0 %v815
    %817 = vmatprep.subr.mxu0 0.0
    %v818 = vand.u32 %v105, 4294901760
    %819 = vmatpush1.xpose.msra.mxu0 %v818
    %820 = vmatprep.subr.mxu0 0.0
    %v821 = vand.u32 %v108, 4294901760
    %822 = vmatpush1.xpose.msra.mxu0 %v821
    %823 = vmatprep.subr.mxu0 0.0
    %v824 = vand.u32 %v111, 4294901760
    %825 = vmatpush1.xpose.msra.mxu0 %v824
    %826 = vmatprep.subr.mxu0 0.0
    %v827 = vand.u32 %v114, 4294901760
    %828 = vmatpush1.xpose.msra.mxu0 %v827
    %829 = vmatprep.subr.mxu0 0.0
    %v830 = vand.u32 %v117, 4294901760
    %831 = vmatpush1.xpose.msra.mxu0 %v830
    %832 = vmatprep.subr.mxu0 0.0
    %v833 = vand.u32 %v120, 4294901760
    %834 = vmatpush1.xpose.msra.mxu0 %v833
    %835 = vmatprep.subr.mxu0 0.0
    %836 = vmatpush1.xpose.msra.mxu0 0.0
    %837 = vmatprep.subr.mxu0 0.0
    %838 = vmatpush1.xpose.msra.mxu0 0.0
    %839 = vmatprep.subr.mxu0 0.0
    %840 = vmatpush1.xpose.msra.mxu0 0.0
    %841 = vmatprep.subr.mxu0 0.0
    %842 = vmatpush1.xpose.msra.mxu0 0.0
    %843 = vmatprep.subr.mxu0 0.0
    %844 = vmatpush1.xpose.msra.mxu0 0.0
    %845 = vmatprep.subr.mxu0 0.0
    %846 = vmatpush1.xpose.msra.mxu0 0.0
    %847 = vmatprep.subr.mxu0 0.0
    %848 = vmatpush1.xpose.msra.mxu0 0.0
    %849 = vmatprep.subr.mxu0 0.0
    %850 = vmatpush1.xpose.msra.mxu0 0.0
    %851 = vmatprep.subr.mxu0 0.0
    %852 = vmatpush1.xpose.msra.mxu0 0.0
    %853 = vmatprep.subr.mxu0 0.0
    %854 = vmatpush1.xpose.msra.mxu0 0.0
    %855 = vmatprep.subr.mxu0 0.0
    %856 = vmatpush1.xpose.msra.mxu0 0.0
    %857 = vmatprep.subr.mxu0 0.0
    %858 = vmatpush1.xpose.msra.mxu0 0.0
    %859 = vmatprep.subr.mxu0 0.0
    %860 = vmatpush1.xpose.msra.mxu0 0.0
    %861 = vmatprep.subr.mxu0 0.0
    %862 = vmatpush1.xpose.msra.mxu0 0.0
    %863 = vmatprep.subr.mxu0 0.0
    %864 = vmatpush1.xpose.msra.mxu0 0.0
    %865 = vmatprep.subr.mxu0 0.0
    %866 = vmatpush1.xpose.msra.mxu0 0.0
    %867 = vmatprep.mubr.f32.mxu0 0.0
    %v868 = vand.u32 %v63, 4294901760
    %869 = vmatmul.mubr.f32.gmra.mrb[0].mxu0 %v868
    %v870 = vpop.f32.mrb[0].mxu0
    %v871 = vadd.f32 %v766, %v870
    %v872 = vpop.f32.mrb[0].mxu0
    %873 = vmatprep.mubr.f32.mxu0 0.0
    %v874 = vand.u32 %v66, 4294901760
    %875 = vmatmul.mubr.f32.gmra.mrb[0].mxu0 %v874
    %v876 = vpop.f32.mrb[0].mxu0
    %v877 = vadd.f32 %v772, %v876
    %v878 = vpop.f32.mrb[0].mxu0
    %879 = vmatprep.mubr.f32.mxu0 0.0
    %v880 = vand.u32 %v69, 4294901760
    %881 = vmatmul.mubr.f32.gmra.mrb[0].mxu0 %v880
    %v882 = vpop.f32.mrb[0].mxu0
    %v883 = vadd.f32 %v778, %v882
    %v884 = vpop.f32.mrb[0].mxu0
    %885 = vmatprep.mubr.f32.mxu0 0.0
    %v886 = vand.u32 %v72, 4294901760
    %887 = vmatmul.mubr.f32.gmra.mrb[0].mxu0 %v886
    %v888 = vpop.f32.mrb[0].mxu0
    %v889 = vadd.f32 %v784, %v888
    %v890 = vpop.f32.mrb[0].mxu0
    %891 = vdwg.mxu0
    %v892 = vmax.f32 %v871, %v877
    %v893 = vmax.f32 %v883, %v889
    %v894 = vmax.f32 %v892, %v893
    %v895 = vrot.slane %v894, 4
    %v896 = vmax.f32 %v894, %v895
    %v897 = vrot.slane %v896, 2
    %v898 = vmax.f32 %v896, %v897
    %v899 = vrot.slane %v898, 1
    %v900 = vmax.f32 %v898, %v899
    %v901 = vsub.f32 %v900, 1.0
    %v902 = vsub.f32 %v900, 0.03125
    %v903 = vsub.f32 %v902, %v901
    %v904 = vmul.f32 %v903, 0.5
    %v905 = vadd.f32 %v901, %v904
    %v906 = vsub.f32 %v871, %v905
    %v907 = vsub.f32 %v877, %v905
    %v908 = vsub.f32 %v883, %v905
    %v909 = vsub.f32 %v889, %v905
    %v910 = vmax.f32 %v906, 0.0
    %v911 = vmax.f32 %v907, 0.0
    %v912 = vmax.f32 %v908, 0.0
    %v913 = vmax.f32 %v909, 0.0
    %v914 = vlog2.pop %v910
    %v915 = vmul.f32 %v914, 0.6931472
    %v916 = vlog2.pop %v911
    %v917 = vmul.f32 %v916, 0.6931472
    %v918 = vlog2.pop %v912
    %v919 = vmul.f32 %v918, 0.6931472
    %v920 = vlog2.pop %v913
    %v921 = vmul.f32 %v920, 0.6931472
    %v922 = vmul.f32 %v915, 0.032258064
    %v923 = vmul.f32 %v917, 0.032258064
    %v924 = vmul.f32 %v919, 0.032258064
    %v925 = vmul.f32 %v921, 0.032258064
    %v926 = vmul.f32 %v922, 1.442695
    %v927 = vpow.pop %v926
    %v928 = vmul.f32 %v923, 1.442695
    %v929 = vpow.pop %v928
    %v930 = vmul.f32 %v924, 1.442695
    %v931 = vpow.pop %v930
    %v932 = vmul.f32 %v925, 1.442695
    %v933 = vpow.pop %v932
    %v934 = vadd.f32 %v927, %v929
    %v935 = vadd.f32 %v934, %v931
    %v936 = vadd.f32 %v935, %v933
    %v937 = vrot.slane %v936, 4
    %v938 = vadd.f32 %v936, %v937
    %v939 = vrot.slane %v938, 2
    %v940 = vadd.f32 %v938, %v939
    %v941 = vrot.slane %v940, 1
    %v942 = vadd.f32 %v940, %v941
    %v943 = vsub.f32 %v942, 1.0
    %vm944 = vcmp.ge.f32.partialorder %v943, 0.0
    %v945 = vsel %vm944, %v905, %v901
    %v946 = vmul.f32 %v904, 0.5
    %v947 = vadd.f32 %v945, %v946
    %v948 = vsub.f32 %v871, %v947
    %v949 = vsub.f32 %v877, %v947
    %v950 = vsub.f32 %v883, %v947
    %v951 = vsub.f32 %v889, %v947
    %v952 = vmax.f32 %v948, 0.0
    %v953 = vmax.f32 %v949, 0.0
    %v954 = vmax.f32 %v950, 0.0
    %v955 = vmax.f32 %v951, 0.0
    %v956 = vlog2.pop %v952
    %v957 = vmul.f32 %v956, 0.6931472
    %v958 = vlog2.pop %v953
    %v959 = vmul.f32 %v958, 0.6931472
    %v960 = vlog2.pop %v954
    %v961 = vmul.f32 %v960, 0.6931472
    %v962 = vlog2.pop %v955
    %v963 = vmul.f32 %v962, 0.6931472
    %v964 = vmul.f32 %v957, 0.032258064
    %v965 = vmul.f32 %v959, 0.032258064
    %v966 = vmul.f32 %v961, 0.032258064
    %v967 = vmul.f32 %v963, 0.032258064
    %v968 = vmul.f32 %v964, 1.442695
    %v969 = vpow.pop %v968
    %v970 = vmul.f32 %v965, 1.442695
    %v971 = vpow.pop %v970
    %v972 = vmul.f32 %v966, 1.442695
    %v973 = vpow.pop %v972
    %v974 = vmul.f32 %v967, 1.442695
    %v975 = vpow.pop %v974
    %v976 = vadd.f32 %v969, %v971
    %v977 = vadd.f32 %v976, %v973
    %v978 = vadd.f32 %v977, %v975
    %v979 = vrot.slane %v978, 4
    %v980 = vadd.f32 %v978, %v979
    %v981 = vrot.slane %v980, 2
    %v982 = vadd.f32 %v980, %v981
    %v983 = vrot.slane %v982, 1
    %v984 = vadd.f32 %v982, %v983
    %v985 = vsub.f32 %v984, 1.0
    %vm986 = vcmp.ge.f32.partialorder %v985, 0.0
    %v987 = vsel %vm986, %v947, %v945
    %v988 = vmul.f32 %v946, 0.5
    %v989 = vadd.f32 %v987, %v988
    %v990 = vsub.f32 %v871, %v989
    %v991 = vsub.f32 %v877, %v989
    %v992 = vsub.f32 %v883, %v989
    %v993 = vsub.f32 %v889, %v989
    %v994 = vmax.f32 %v990, 0.0
    %v995 = vmax.f32 %v991, 0.0
    %v996 = vmax.f32 %v992, 0.0
    %v997 = vmax.f32 %v993, 0.0
    %v998 = vlog2.pop %v994
    %v999 = vmul.f32 %v998, 0.6931472
    %v1000 = vlog2.pop %v995
    %v1001 = vmul.f32 %v1000, 0.6931472
    %v1002 = vlog2.pop %v996
    %v1003 = vmul.f32 %v1002, 0.6931472
    %v1004 = vlog2.pop %v997
    %v1005 = vmul.f32 %v1004, 0.6931472
    %v1006 = vmul.f32 %v999, 0.032258064
    %v1007 = vmul.f32 %v1001, 0.032258064
    %v1008 = vmul.f32 %v1003, 0.032258064
    %v1009 = vmul.f32 %v1005, 0.032258064
    %v1010 = vmul.f32 %v1006, 1.442695
    %v1011 = vpow.pop %v1010
    %v1012 = vmul.f32 %v1007, 1.442695
    %v1013 = vpow.pop %v1012
    %v1014 = vmul.f32 %v1008, 1.442695
    %v1015 = vpow.pop %v1014
    %v1016 = vmul.f32 %v1009, 1.442695
    %v1017 = vpow.pop %v1016
    %v1018 = vadd.f32 %v1011, %v1013
    %v1019 = vadd.f32 %v1018, %v1015
    %v1020 = vadd.f32 %v1019, %v1017
    %v1021 = vrot.slane %v1020, 4
    %v1022 = vadd.f32 %v1020, %v1021
    %v1023 = vrot.slane %v1022, 2
    %v1024 = vadd.f32 %v1022, %v1023
    %v1025 = vrot.slane %v1024, 1
    %v1026 = vadd.f32 %v1024, %v1025
    %v1027 = vsub.f32 %v1026, 1.0
    %vm1028 = vcmp.ge.f32.partialorder %v1027, 0.0
    %v1029 = vsel %vm1028, %v989, %v987
    %v1030 = vmul.f32 %v988, 0.5
    %v1031 = vadd.f32 %v1029, %v1030
    %v1032 = vsub.f32 %v871, %v1031
    %v1033 = vsub.f32 %v877, %v1031
    %v1034 = vsub.f32 %v883, %v1031
    %v1035 = vsub.f32 %v889, %v1031
    %v1036 = vmax.f32 %v1032, 0.0
    %v1037 = vmax.f32 %v1033, 0.0
    %v1038 = vmax.f32 %v1034, 0.0
    %v1039 = vmax.f32 %v1035, 0.0
    %v1040 = vlog2.pop %v1036
    %v1041 = vmul.f32 %v1040, 0.6931472
    %v1042 = vlog2.pop %v1037
    %v1043 = vmul.f32 %v1042, 0.6931472
    %v1044 = vlog2.pop %v1038
    %v1045 = vmul.f32 %v1044, 0.6931472
    %v1046 = vlog2.pop %v1039
    %v1047 = vmul.f32 %v1046, 0.6931472
    %v1048 = vmul.f32 %v1041, 0.032258064
    %v1049 = vmul.f32 %v1043, 0.032258064
    %v1050 = vmul.f32 %v1045, 0.032258064
    %v1051 = vmul.f32 %v1047, 0.032258064
    %v1052 = vmul.f32 %v1048, 1.442695
    %v1053 = vpow.pop %v1052
    %v1054 = vmul.f32 %v1049, 1.442695
    %v1055 = vpow.pop %v1054
    %v1056 = vmul.f32 %v1050, 1.442695
    %v1057 = vpow.pop %v1056
    %v1058 = vmul.f32 %v1051, 1.442695
    %v1059 = vpow.pop %v1058
    %v1060 = vadd.f32 %v1053, %v1055
    %v1061 = vadd.f32 %v1060, %v1057
    %v1062 = vadd.f32 %v1061, %v1059
    %v1063 = vrot.slane %v1062, 4
    %v1064 = vadd.f32 %v1062, %v1063
    %v1065 = vrot.slane %v1064, 2
    %v1066 = vadd.f32 %v1064, %v1065
    %v1067 = vrot.slane %v1066, 1
    %v1068 = vadd.f32 %v1066, %v1067
    %v1069 = vsub.f32 %v1068, 1.0
    %vm1070 = vcmp.ge.f32.partialorder %v1069, 0.0
    %v1071 = vsel %vm1070, %v1031, %v1029
    %v1072 = vmul.f32 %v1030, 0.5
    %v1073 = vadd.f32 %v1071, %v1072
    %v1074 = vsub.f32 %v871, %v1073
    %v1075 = vsub.f32 %v877, %v1073
    %v1076 = vsub.f32 %v883, %v1073
    %v1077 = vsub.f32 %v889, %v1073
    %v1078 = vmax.f32 %v1074, 0.0
    %v1079 = vmax.f32 %v1075, 0.0
    %v1080 = vmax.f32 %v1076, 0.0
    %v1081 = vmax.f32 %v1077, 0.0
    %v1082 = vlog2.pop %v1078
    %v1083 = vmul.f32 %v1082, 0.6931472
    %v1084 = vlog2.pop %v1079
    %v1085 = vmul.f32 %v1084, 0.6931472
    %v1086 = vlog2.pop %v1080
    %v1087 = vmul.f32 %v1086, 0.6931472
    %v1088 = vlog2.pop %v1081
    %v1089 = vmul.f32 %v1088, 0.6931472
    %v1090 = vmul.f32 %v1083, 0.032258064
    %v1091 = vmul.f32 %v1085, 0.032258064
    %v1092 = vmul.f32 %v1087, 0.032258064
    %v1093 = vmul.f32 %v1089, 0.032258064
    %v1094 = vmul.f32 %v1090, 1.442695
    %v1095 = vpow.pop %v1094
    %v1096 = vmul.f32 %v1091, 1.442695
    %v1097 = vpow.pop %v1096
    %v1098 = vmul.f32 %v1092, 1.442695
    %v1099 = vpow.pop %v1098
    %v1100 = vmul.f32 %v1093, 1.442695
    %v1101 = vpow.pop %v1100
    %v1102 = vadd.f32 %v1095, %v1097
    %v1103 = vadd.f32 %v1102, %v1099
    %v1104 = vadd.f32 %v1103, %v1101
    %v1105 = vrot.slane %v1104, 4
    %v1106 = vadd.f32 %v1104, %v1105
    %v1107 = vrot.slane %v1106, 2
    %v1108 = vadd.f32 %v1106, %v1107
    %v1109 = vrot.slane %v1108, 1
    %v1110 = vadd.f32 %v1108, %v1109
    %v1111 = vsub.f32 %v1110, 1.0
    %vm1112 = vcmp.ge.f32.partialorder %v1111, 0.0
    %v1113 = vsel %vm1112, %v1073, %v1071
    %v1114 = vmul.f32 %v1072, 0.5
    %v1115 = vadd.f32 %v1113, %v1114
    %v1116 = vsub.f32 %v871, %v1115
    %v1117 = vsub.f32 %v877, %v1115
    %v1118 = vsub.f32 %v883, %v1115
    %v1119 = vsub.f32 %v889, %v1115
    %v1120 = vmax.f32 %v1116, 0.0
    %v1121 = vmax.f32 %v1117, 0.0
    %v1122 = vmax.f32 %v1118, 0.0
    %v1123 = vmax.f32 %v1119, 0.0
    %v1124 = vlog2.pop %v1120
    %v1125 = vmul.f32 %v1124, 0.6931472
    %v1126 = vlog2.pop %v1121
    %v1127 = vmul.f32 %v1126, 0.6931472
    %v1128 = vlog2.pop %v1122
    %v1129 = vmul.f32 %v1128, 0.6931472
    %v1130 = vlog2.pop %v1123
    %v1131 = vmul.f32 %v1130, 0.6931472
    %v1132 = vmul.f32 %v1125, 0.032258064
    %v1133 = vmul.f32 %v1127, 0.032258064
    %v1134 = vmul.f32 %v1129, 0.032258064
    %v1135 = vmul.f32 %v1131, 0.032258064
    %v1136 = vmul.f32 %v1132, 1.442695
    %v1137 = vpow.pop %v1136
    %v1138 = vmul.f32 %v1133, 1.442695
    %v1139 = vpow.pop %v1138
    %v1140 = vmul.f32 %v1134, 1.442695
    %v1141 = vpow.pop %v1140
    %v1142 = vmul.f32 %v1135, 1.442695
    %v1143 = vpow.pop %v1142
    %v1144 = vadd.f32 %v1137, %v1139
    %v1145 = vadd.f32 %v1144, %v1141
    %v1146 = vadd.f32 %v1145, %v1143
    %v1147 = vrot.slane %v1146, 4
    %v1148 = vadd.f32 %v1146, %v1147
    %v1149 = vrot.slane %v1148, 2
    %v1150 = vadd.f32 %v1148, %v1149
    %v1151 = vrot.slane %v1150, 1
    %v1152 = vadd.f32 %v1150, %v1151
    %v1153 = vsub.f32 %v1152, 1.0
    %vm1154 = vcmp.ge.f32.partialorder %v1153, 0.0
    %v1155 = vsel %vm1154, %v1115, %v1113
    %v1156 = vmul.f32 %v1114, 0.5
    %v1157 = vadd.f32 %v1155, %v1156
    %v1158 = vsub.f32 %v871, %v1157
    %v1159 = vsub.f32 %v877, %v1157
    %v1160 = vsub.f32 %v883, %v1157
    %v1161 = vsub.f32 %v889, %v1157
    %v1162 = vmax.f32 %v1158, 0.0
    %v1163 = vmax.f32 %v1159, 0.0
    %v1164 = vmax.f32 %v1160, 0.0
    %v1165 = vmax.f32 %v1161, 0.0
    %v1166 = vlog2.pop %v1162
    %v1167 = vmul.f32 %v1166, 0.6931472
    %v1168 = vlog2.pop %v1163
    %v1169 = vmul.f32 %v1168, 0.6931472
    %v1170 = vlog2.pop %v1164
    %v1171 = vmul.f32 %v1170, 0.6931472
    %v1172 = vlog2.pop %v1165
    %v1173 = vmul.f32 %v1172, 0.6931472
    %v1174 = vmul.f32 %v1167, 0.032258064
    %v1175 = vmul.f32 %v1169, 0.032258064
    %v1176 = vmul.f32 %v1171, 0.032258064
    %v1177 = vmul.f32 %v1173, 0.032258064
    %v1178 = vmul.f32 %v1174, 1.442695
    %v1179 = vpow.pop %v1178
    %v1180 = vmul.f32 %v1175, 1.442695
    %v1181 = vpow.pop %v1180
    %v1182 = vmul.f32 %v1176, 1.442695
    %v1183 = vpow.pop %v1182
    %v1184 = vmul.f32 %v1177, 1.442695
    %v1185 = vpow.pop %v1184
    %v1186 = vadd.f32 %v1179, %v1181
    %v1187 = vadd.f32 %v1186, %v1183
    %v1188 = vadd.f32 %v1187, %v1185
    %v1189 = vrot.slane %v1188, 4
    %v1190 = vadd.f32 %v1188, %v1189
    %v1191 = vrot.slane %v1190, 2
    %v1192 = vadd.f32 %v1190, %v1191
    %v1193 = vrot.slane %v1192, 1
    %v1194 = vadd.f32 %v1192, %v1193
    %v1195 = vsub.f32 %v1194, 1.0
    %vm1196 = vcmp.ge.f32.partialorder %v1195, 0.0
    %v1197 = vsel %vm1196, %v1157, %v1155
    %v1198 = vmul.f32 %v1156, 0.5
    %v1199 = vadd.f32 %v1197, %v1198
    %v1200 = vsub.f32 %v871, %v1199
    %v1201 = vsub.f32 %v877, %v1199
    %v1202 = vsub.f32 %v883, %v1199
    %v1203 = vsub.f32 %v889, %v1199
    %v1204 = vmax.f32 %v1200, 0.0
    %v1205 = vmax.f32 %v1201, 0.0
    %v1206 = vmax.f32 %v1202, 0.0
    %v1207 = vmax.f32 %v1203, 0.0
    %v1208 = vlog2.pop %v1204
    %v1209 = vmul.f32 %v1208, 0.6931472
    %v1210 = vlog2.pop %v1205
    %v1211 = vmul.f32 %v1210, 0.6931472
    %v1212 = vlog2.pop %v1206
    %v1213 = vmul.f32 %v1212, 0.6931472
    %v1214 = vlog2.pop %v1207
    %v1215 = vmul.f32 %v1214, 0.6931472
    %v1216 = vmul.f32 %v1209, 0.032258064
    %v1217 = vmul.f32 %v1211, 0.032258064
    %v1218 = vmul.f32 %v1213, 0.032258064
    %v1219 = vmul.f32 %v1215, 0.032258064
    %v1220 = vmul.f32 %v1216, 1.442695
    %v1221 = vpow.pop %v1220
    %v1222 = vmul.f32 %v1217, 1.442695
    %v1223 = vpow.pop %v1222
    %v1224 = vmul.f32 %v1218, 1.442695
    %v1225 = vpow.pop %v1224
    %v1226 = vmul.f32 %v1219, 1.442695
    %v1227 = vpow.pop %v1226
    %v1228 = vadd.f32 %v1221, %v1223
    %v1229 = vadd.f32 %v1228, %v1225
    %v1230 = vadd.f32 %v1229, %v1227
    %v1231 = vrot.slane %v1230, 4
    %v1232 = vadd.f32 %v1230, %v1231
    %v1233 = vrot.slane %v1232, 2
    %v1234 = vadd.f32 %v1232, %v1233
    %v1235 = vrot.slane %v1234, 1
    %v1236 = vadd.f32 %v1234, %v1235
    %v1237 = vsub.f32 %v1236, 1.0
    %vm1238 = vcmp.ge.f32.partialorder %v1237, 0.0
    %v1239 = vsel %vm1238, %v1199, %v1197
    %v1240 = vmul.f32 %v1198, 0.5
    %v1241 = vadd.f32 %v1239, %v1240
    %v1242 = vsub.f32 %v871, %v1241
    %v1243 = vsub.f32 %v877, %v1241
    %v1244 = vsub.f32 %v883, %v1241
    %v1245 = vsub.f32 %v889, %v1241
    %v1246 = vmax.f32 %v1242, 0.0
    %v1247 = vmax.f32 %v1243, 0.0
    %v1248 = vmax.f32 %v1244, 0.0
    %v1249 = vmax.f32 %v1245, 0.0
    %v1250 = vlog2.pop %v1246
    %v1251 = vmul.f32 %v1250, 0.6931472
    %v1252 = vlog2.pop %v1247
    %v1253 = vmul.f32 %v1252, 0.6931472
    %v1254 = vlog2.pop %v1248
    %v1255 = vmul.f32 %v1254, 0.6931472
    %v1256 = vlog2.pop %v1249
    %v1257 = vmul.f32 %v1256, 0.6931472
    %v1258 = vmul.f32 %v1251, 0.032258064
    %v1259 = vmul.f32 %v1253, 0.032258064
    %v1260 = vmul.f32 %v1255, 0.032258064
    %v1261 = vmul.f32 %v1257, 0.032258064
    %v1262 = vmul.f32 %v1258, 1.442695
    %v1263 = vpow.pop %v1262
    %v1264 = vmul.f32 %v1259, 1.442695
    %v1265 = vpow.pop %v1264
    %v1266 = vmul.f32 %v1260, 1.442695
    %v1267 = vpow.pop %v1266
    %v1268 = vmul.f32 %v1261, 1.442695
    %v1269 = vpow.pop %v1268
    %v1270 = vadd.f32 %v1263, %v1265
    %v1271 = vadd.f32 %v1270, %v1267
    %v1272 = vadd.f32 %v1271, %v1269
    %v1273 = vrot.slane %v1272, 4
    %v1274 = vadd.f32 %v1272, %v1273
    %v1275 = vrot.slane %v1274, 2
    %v1276 = vadd.f32 %v1274, %v1275
    %v1277 = vrot.slane %v1276, 1
    %v1278 = vadd.f32 %v1276, %v1277
    %v1279 = vsub.f32 %v1278, 1.0
    %vm1280 = vcmp.ge.f32.partialorder %v1279, 0.0
    %v1281 = vsel %vm1280, %v1241, %v1239
    %v1282 = vmul.f32 %v1240, 0.5
    %v1283 = vadd.f32 %v1281, %v1282
    %v1284 = vsub.f32 %v871, %v1283
    %v1285 = vsub.f32 %v877, %v1283
    %v1286 = vsub.f32 %v883, %v1283
    %v1287 = vsub.f32 %v889, %v1283
    %v1288 = vmax.f32 %v1284, 0.0
    %v1289 = vmax.f32 %v1285, 0.0
    %v1290 = vmax.f32 %v1286, 0.0
    %v1291 = vmax.f32 %v1287, 0.0
    %v1292 = vlog2.pop %v1288
    %v1293 = vmul.f32 %v1292, 0.6931472
    %v1294 = vlog2.pop %v1289
    %v1295 = vmul.f32 %v1294, 0.6931472
    %v1296 = vlog2.pop %v1290
    %v1297 = vmul.f32 %v1296, 0.6931472
    %v1298 = vlog2.pop %v1291
    %v1299 = vmul.f32 %v1298, 0.6931472
    %v1300 = vmul.f32 %v1293, 0.032258064
    %v1301 = vmul.f32 %v1295, 0.032258064
    %v1302 = vmul.f32 %v1297, 0.032258064
    %v1303 = vmul.f32 %v1299, 0.032258064
    %v1304 = vmul.f32 %v1300, 1.442695
    %v1305 = vpow.pop %v1304
    %v1306 = vmul.f32 %v1301, 1.442695
    %v1307 = vpow.pop %v1306
    %v1308 = vmul.f32 %v1302, 1.442695
    %v1309 = vpow.pop %v1308
    %v1310 = vmul.f32 %v1303, 1.442695
    %v1311 = vpow.pop %v1310
    %v1312 = vadd.f32 %v1305, %v1307
    %v1313 = vadd.f32 %v1312, %v1309
    %v1314 = vadd.f32 %v1313, %v1311
    %v1315 = vrot.slane %v1314, 4
    %v1316 = vadd.f32 %v1314, %v1315
    %v1317 = vrot.slane %v1316, 2
    %v1318 = vadd.f32 %v1316, %v1317
    %v1319 = vrot.slane %v1318, 1
    %v1320 = vadd.f32 %v1318, %v1319
    %v1321 = vsub.f32 %v1320, 1.0
    %vm1322 = vcmp.ge.f32.partialorder %v1321, 0.0
    %v1323 = vsel %vm1322, %v1283, %v1281
    %v1324 = vmul.f32 %v1282, 0.5
    %v1325 = vadd.f32 %v1323, %v1324
    %v1326 = vsub.f32 %v871, %v1325
    %v1327 = vsub.f32 %v877, %v1325
    %v1328 = vsub.f32 %v883, %v1325
    %v1329 = vsub.f32 %v889, %v1325
    %v1330 = vmax.f32 %v1326, 0.0
    %v1331 = vmax.f32 %v1327, 0.0
    %v1332 = vmax.f32 %v1328, 0.0
    %v1333 = vmax.f32 %v1329, 0.0
    %v1334 = vlog2.pop %v1330
    %v1335 = vmul.f32 %v1334, 0.6931472
    %v1336 = vlog2.pop %v1331
    %v1337 = vmul.f32 %v1336, 0.6931472
    %v1338 = vlog2.pop %v1332
    %v1339 = vmul.f32 %v1338, 0.6931472
    %v1340 = vlog2.pop %v1333
    %v1341 = vmul.f32 %v1340, 0.6931472
    %v1342 = vmul.f32 %v1335, 0.032258064
    %v1343 = vmul.f32 %v1337, 0.032258064
    %v1344 = vmul.f32 %v1339, 0.032258064
    %v1345 = vmul.f32 %v1341, 0.032258064
    %v1346 = vmul.f32 %v1342, 1.442695
    %v1347 = vpow.pop %v1346
    %v1348 = vmul.f32 %v1343, 1.442695
    %v1349 = vpow.pop %v1348
    %v1350 = vmul.f32 %v1344, 1.442695
    %v1351 = vpow.pop %v1350
    %v1352 = vmul.f32 %v1345, 1.442695
    %v1353 = vpow.pop %v1352
    %v1354 = vadd.f32 %v1347, %v1349
    %v1355 = vadd.f32 %v1354, %v1351
    %v1356 = vadd.f32 %v1355, %v1353
    %v1357 = vrot.slane %v1356, 4
    %v1358 = vadd.f32 %v1356, %v1357
    %v1359 = vrot.slane %v1358, 2
    %v1360 = vadd.f32 %v1358, %v1359
    %v1361 = vrot.slane %v1360, 1
    %v1362 = vadd.f32 %v1360, %v1361
    %v1363 = vsub.f32 %v1362, 1.0
    %vm1364 = vcmp.ge.f32.partialorder %v1363, 0.0
    %v1365 = vsel %vm1364, %v1325, %v1323
    %v1366 = vmul.f32 %v1324, 0.5
    %v1367 = vadd.f32 %v1365, %v1366
    %v1368 = vsub.f32 %v871, %v1367
    %v1369 = vsub.f32 %v877, %v1367
    %v1370 = vsub.f32 %v883, %v1367
    %v1371 = vsub.f32 %v889, %v1367
    %v1372 = vmax.f32 %v1368, 0.0
    %v1373 = vmax.f32 %v1369, 0.0
    %v1374 = vmax.f32 %v1370, 0.0
    %v1375 = vmax.f32 %v1371, 0.0
    %v1376 = vlog2.pop %v1372
    %v1377 = vmul.f32 %v1376, 0.6931472
    %v1378 = vlog2.pop %v1373
    %v1379 = vmul.f32 %v1378, 0.6931472
    %v1380 = vlog2.pop %v1374
    %v1381 = vmul.f32 %v1380, 0.6931472
    %v1382 = vlog2.pop %v1375
    %v1383 = vmul.f32 %v1382, 0.6931472
    %v1384 = vmul.f32 %v1377, 0.032258064
    %v1385 = vmul.f32 %v1379, 0.032258064
    %v1386 = vmul.f32 %v1381, 0.032258064
    %v1387 = vmul.f32 %v1383, 0.032258064
    %v1388 = vmul.f32 %v1384, 1.442695
    %v1389 = vpow.pop %v1388
    %v1390 = vmul.f32 %v1385, 1.442695
    %v1391 = vpow.pop %v1390
    %v1392 = vmul.f32 %v1386, 1.442695
    %v1393 = vpow.pop %v1392
    %v1394 = vmul.f32 %v1387, 1.442695
    %v1395 = vpow.pop %v1394
    %v1396 = vadd.f32 %v1389, %v1391
    %v1397 = vadd.f32 %v1396, %v1393
    %v1398 = vadd.f32 %v1397, %v1395
    %v1399 = vrot.slane %v1398, 4
    %v1400 = vadd.f32 %v1398, %v1399
    %v1401 = vrot.slane %v1400, 2
    %v1402 = vadd.f32 %v1400, %v1401
    %v1403 = vrot.slane %v1402, 1
    %v1404 = vadd.f32 %v1402, %v1403
    %v1405 = vsub.f32 %v1404, 1.0
    %vm1406 = vcmp.ge.f32.partialorder %v1405, 0.0
    %v1407 = vsel %vm1406, %v1367, %v1365
    %v1408 = vmul.f32 %v1366, 0.5
    %v1409 = vadd.f32 %v1407, %v1408
    %v1410 = vsub.f32 %v871, %v1409
    %v1411 = vsub.f32 %v877, %v1409
    %v1412 = vsub.f32 %v883, %v1409
    %v1413 = vsub.f32 %v889, %v1409
    %v1414 = vmax.f32 %v1410, 0.0
    %v1415 = vmax.f32 %v1411, 0.0
    %v1416 = vmax.f32 %v1412, 0.0
    %v1417 = vmax.f32 %v1413, 0.0
    %v1418 = vlog2.pop %v1414
    %v1419 = vmul.f32 %v1418, 0.6931472
    %v1420 = vlog2.pop %v1415
    %v1421 = vmul.f32 %v1420, 0.6931472
    %v1422 = vlog2.pop %v1416
    %v1423 = vmul.f32 %v1422, 0.6931472
    %v1424 = vlog2.pop %v1417
    %v1425 = vmul.f32 %v1424, 0.6931472
    %v1426 = vmul.f32 %v1419, 0.032258064
    %v1427 = vmul.f32 %v1421, 0.032258064
    %v1428 = vmul.f32 %v1423, 0.032258064
    %v1429 = vmul.f32 %v1425, 0.032258064
    %v1430 = vmul.f32 %v1426, 1.442695
    %v1431 = vpow.pop %v1430
    %v1432 = vmul.f32 %v1427, 1.442695
    %v1433 = vpow.pop %v1432
    %v1434 = vmul.f32 %v1428, 1.442695
    %v1435 = vpow.pop %v1434
    %v1436 = vmul.f32 %v1429, 1.442695
    %v1437 = vpow.pop %v1436
    %v1438 = vadd.f32 %v1431, %v1433
    %v1439 = vadd.f32 %v1438, %v1435
    %v1440 = vadd.f32 %v1439, %v1437
    %v1441 = vrot.slane %v1440, 4
    %v1442 = vadd.f32 %v1440, %v1441
    %v1443 = vrot.slane %v1442, 2
    %v1444 = vadd.f32 %v1442, %v1443
    %v1445 = vrot.slane %v1444, 1
    %v1446 = vadd.f32 %v1444, %v1445
    %v1447 = vsub.f32 %v1446, 1.0
    %vm1448 = vcmp.ge.f32.partialorder %v1447, 0.0
    %v1449 = vsel %vm1448, %v1409, %v1407
    %v1450 = vmul.f32 %v1408, 0.5
    %v1451 = vadd.f32 %v1449, %v1450
    %v1452 = vsub.f32 %v871, %v1451
    %v1453 = vsub.f32 %v877, %v1451
    %v1454 = vsub.f32 %v883, %v1451
    %v1455 = vsub.f32 %v889, %v1451
    %v1456 = vmax.f32 %v1452, 0.0
    %v1457 = vmax.f32 %v1453, 0.0
    %v1458 = vmax.f32 %v1454, 0.0
    %v1459 = vmax.f32 %v1455, 0.0
    %v1460 = vlog2.pop %v1456
    %v1461 = vmul.f32 %v1460, 0.6931472
    %v1462 = vlog2.pop %v1457
    %v1463 = vmul.f32 %v1462, 0.6931472
    %v1464 = vlog2.pop %v1458
    %v1465 = vmul.f32 %v1464, 0.6931472
    %v1466 = vlog2.pop %v1459
    %v1467 = vmul.f32 %v1466, 0.6931472
    %v1468 = vmul.f32 %v1461, 0.032258064
    %v1469 = vmul.f32 %v1463, 0.032258064
    %v1470 = vmul.f32 %v1465, 0.032258064
    %v1471 = vmul.f32 %v1467, 0.032258064
    %v1472 = vmul.f32 %v1468, 1.442695
    %v1473 = vpow.pop %v1472
    %v1474 = vmul.f32 %v1469, 1.442695
    %v1475 = vpow.pop %v1474
    %v1476 = vmul.f32 %v1470, 1.442695
    %v1477 = vpow.pop %v1476
    %v1478 = vmul.f32 %v1471, 1.442695
    %v1479 = vpow.pop %v1478
    %v1480 = vadd.f32 %v1473, %v1475
    %v1481 = vadd.f32 %v1480, %v1477
    %v1482 = vadd.f32 %v1481, %v1479
    %v1483 = vrot.slane %v1482, 4
    %v1484 = vadd.f32 %v1482, %v1483
    %v1485 = vrot.slane %v1484, 2
    %v1486 = vadd.f32 %v1484, %v1485
    %v1487 = vrot.slane %v1486, 1
    %v1488 = vadd.f32 %v1486, %v1487
    %v1489 = vsub.f32 %v1488, 1.0
    %vm1490 = vcmp.ge.f32.partialorder %v1489, 0.0
    %v1491 = vsel %vm1490, %v1451, %v1449
    %v1492 = vmul.f32 %v1450, 0.5
    %v1493 = vadd.f32 %v1491, %v1492
    %v1494 = vsub.f32 %v871, %v1493
    %v1495 = vsub.f32 %v877, %v1493
    %v1496 = vsub.f32 %v883, %v1493
    %v1497 = vsub.f32 %v889, %v1493
    %v1498 = vmax.f32 %v1494, 0.0
    %v1499 = vmax.f32 %v1495, 0.0
    %v1500 = vmax.f32 %v1496, 0.0
    %v1501 = vmax.f32 %v1497, 0.0
    %v1502 = vlog2.pop %v1498
    %v1503 = vmul.f32 %v1502, 0.6931472
    %v1504 = vlog2.pop %v1499
    %v1505 = vmul.f32 %v1504, 0.6931472
    %v1506 = vlog2.pop %v1500
    %v1507 = vmul.f32 %v1506, 0.6931472
    %v1508 = vlog2.pop %v1501
    %v1509 = vmul.f32 %v1508, 0.6931472
    %v1510 = vmul.f32 %v1503, 0.032258064
    %v1511 = vmul.f32 %v1505, 0.032258064
    %v1512 = vmul.f32 %v1507, 0.032258064
    %v1513 = vmul.f32 %v1509, 0.032258064
    %v1514 = vmul.f32 %v1510, 1.442695
    %v1515 = vpow.pop %v1514
    %v1516 = vmul.f32 %v1511, 1.442695
    %v1517 = vpow.pop %v1516
    %v1518 = vmul.f32 %v1512, 1.442695
    %v1519 = vpow.pop %v1518
    %v1520 = vmul.f32 %v1513, 1.442695
    %v1521 = vpow.pop %v1520
    %v1522 = vadd.f32 %v1515, %v1517
    %v1523 = vadd.f32 %v1522, %v1519
    %v1524 = vadd.f32 %v1523, %v1521
    %v1525 = vrot.slane %v1524, 4
    %v1526 = vadd.f32 %v1524, %v1525
    %v1527 = vrot.slane %v1526, 2
    %v1528 = vadd.f32 %v1526, %v1527
    %v1529 = vrot.slane %v1528, 1
    %v1530 = vadd.f32 %v1528, %v1529
    %v1531 = vsub.f32 %v1530, 1.0
    %vm1532 = vcmp.ge.f32.partialorder %v1531, 0.0
    %v1533 = vsel %vm1532, %v1493, %v1491
    %v1534 = vmul.f32 %v1492, 0.5
    %v1535 = vadd.f32 %v1533, %v1534
    %v1536 = vsub.f32 %v871, %v1535
    %v1537 = vsub.f32 %v877, %v1535
    %v1538 = vsub.f32 %v883, %v1535
    %v1539 = vsub.f32 %v889, %v1535
    %v1540 = vmax.f32 %v1536, 0.0
    %v1541 = vmax.f32 %v1537, 0.0
    %v1542 = vmax.f32 %v1538, 0.0
    %v1543 = vmax.f32 %v1539, 0.0
    %v1544 = vlog2.pop %v1540
    %v1545 = vmul.f32 %v1544, 0.6931472
    %v1546 = vlog2.pop %v1541
    %v1547 = vmul.f32 %v1546, 0.6931472
    %v1548 = vlog2.pop %v1542
    %v1549 = vmul.f32 %v1548, 0.6931472
    %v1550 = vlog2.pop %v1543
    %v1551 = vmul.f32 %v1550, 0.6931472
    %v1552 = vmul.f32 %v1545, 0.032258064
    %v1553 = vmul.f32 %v1547, 0.032258064
    %v1554 = vmul.f32 %v1549, 0.032258064
    %v1555 = vmul.f32 %v1551, 0.032258064
    %v1556 = vmul.f32 %v1552, 1.442695
    %v1557 = vpow.pop %v1556
    %v1558 = vmul.f32 %v1553, 1.442695
    %v1559 = vpow.pop %v1558
    %v1560 = vmul.f32 %v1554, 1.442695
    %v1561 = vpow.pop %v1560
    %v1562 = vmul.f32 %v1555, 1.442695
    %v1563 = vpow.pop %v1562
    %v1564 = vadd.f32 %v1557, %v1559
    %v1565 = vadd.f32 %v1564, %v1561
    %v1566 = vadd.f32 %v1565, %v1563
    %v1567 = vrot.slane %v1566, 4
    %v1568 = vadd.f32 %v1566, %v1567
    %v1569 = vrot.slane %v1568, 2
    %v1570 = vadd.f32 %v1568, %v1569
    %v1571 = vrot.slane %v1570, 1
    %v1572 = vadd.f32 %v1570, %v1571
    %v1573 = vsub.f32 %v1572, 1.0
    %vm1574 = vcmp.ge.f32.partialorder %v1573, 0.0
    %v1575 = vsel %vm1574, %v1535, %v1533
    %v1576 = vmul.f32 %v1534, 0.5
    %v1577 = vadd.f32 %v1575, %v1576
    %v1578 = vsub.f32 %v871, %v1577
    %v1579 = vsub.f32 %v877, %v1577
    %v1580 = vsub.f32 %v883, %v1577
    %v1581 = vsub.f32 %v889, %v1577
    %v1582 = vmax.f32 %v1578, 0.0
    %v1583 = vmax.f32 %v1579, 0.0
    %v1584 = vmax.f32 %v1580, 0.0
    %v1585 = vmax.f32 %v1581, 0.0
    %v1586 = vlog2.pop %v1582
    %v1587 = vmul.f32 %v1586, 0.6931472
    %v1588 = vlog2.pop %v1583
    %v1589 = vmul.f32 %v1588, 0.6931472
    %v1590 = vlog2.pop %v1584
    %v1591 = vmul.f32 %v1590, 0.6931472
    %v1592 = vlog2.pop %v1585
    %v1593 = vmul.f32 %v1592, 0.6931472
    %v1594 = vmul.f32 %v1587, 0.032258064
    %v1595 = vmul.f32 %v1589, 0.032258064
    %v1596 = vmul.f32 %v1591, 0.032258064
    %v1597 = vmul.f32 %v1593, 0.032258064
    %v1598 = vmul.f32 %v1594, 1.442695
    %v1599 = vpow.pop %v1598
    %v1600 = vmul.f32 %v1595, 1.442695
    %v1601 = vpow.pop %v1600
    %v1602 = vmul.f32 %v1596, 1.442695
    %v1603 = vpow.pop %v1602
    %v1604 = vmul.f32 %v1597, 1.442695
    %v1605 = vpow.pop %v1604
    %v1606 = vadd.f32 %v1599, %v1601
    %v1607 = vadd.f32 %v1606, %v1603
    %v1608 = vadd.f32 %v1607, %v1605
    %v1609 = vrot.slane %v1608, 4
    %v1610 = vadd.f32 %v1608, %v1609
    %v1611 = vrot.slane %v1610, 2
    %v1612 = vadd.f32 %v1610, %v1611
    %v1613 = vrot.slane %v1612, 1
    %v1614 = vadd.f32 %v1612, %v1613
    %v1615 = vsub.f32 %v1614, 1.0
    %vm1616 = vcmp.ge.f32.partialorder %v1615, 0.0
    %v1617 = vsel %vm1616, %v1577, %v1575
    %v1618 = vmul.f32 %v1576, 0.5
    %v1619 = vadd.f32 %v1617, %v1618
    %v1620 = vsub.f32 %v871, %v1619
    %v1621 = vsub.f32 %v877, %v1619
    %v1622 = vsub.f32 %v883, %v1619
    %v1623 = vsub.f32 %v889, %v1619
    %v1624 = vmax.f32 %v1620, 0.0
    %v1625 = vmax.f32 %v1621, 0.0
    %v1626 = vmax.f32 %v1622, 0.0
    %v1627 = vmax.f32 %v1623, 0.0
    %v1628 = vlog2.pop %v1624
    %v1629 = vmul.f32 %v1628, 0.6931472
    %v1630 = vlog2.pop %v1625
    %v1631 = vmul.f32 %v1630, 0.6931472
    %v1632 = vlog2.pop %v1626
    %v1633 = vmul.f32 %v1632, 0.6931472
    %v1634 = vlog2.pop %v1627
    %v1635 = vmul.f32 %v1634, 0.6931472
    %v1636 = vmul.f32 %v1629, 0.032258064
    %v1637 = vmul.f32 %v1631, 0.032258064
    %v1638 = vmul.f32 %v1633, 0.032258064
    %v1639 = vmul.f32 %v1635, 0.032258064
    %v1640 = vmul.f32 %v1636, 1.442695
    %v1641 = vpow.pop %v1640
    %v1642 = vmul.f32 %v1637, 1.442695
    %v1643 = vpow.pop %v1642
    %v1644 = vmul.f32 %v1638, 1.442695
    %v1645 = vpow.pop %v1644
    %v1646 = vmul.f32 %v1639, 1.442695
    %v1647 = vpow.pop %v1646
    %v1648 = vadd.f32 %v1641, %v1643
    %v1649 = vadd.f32 %v1648, %v1645
    %v1650 = vadd.f32 %v1649, %v1647
    %v1651 = vrot.slane %v1650, 4
    %v1652 = vadd.f32 %v1650, %v1651
    %v1653 = vrot.slane %v1652, 2
    %v1654 = vadd.f32 %v1652, %v1653
    %v1655 = vrot.slane %v1654, 1
    %v1656 = vadd.f32 %v1654, %v1655
    %v1657 = vsub.f32 %v1656, 1.0
    %vm1658 = vcmp.ge.f32.partialorder %v1657, 0.0
    %v1659 = vsel %vm1658, %v1619, %v1617
    %v1660 = vmul.f32 %v1618, 0.5
    %v1661 = vadd.f32 %v1659, %v1660
    %v1662 = vsub.f32 %v871, %v1661
    %v1663 = vsub.f32 %v877, %v1661
    %v1664 = vsub.f32 %v883, %v1661
    %v1665 = vsub.f32 %v889, %v1661
    %v1666 = vmax.f32 %v1662, 0.0
    %v1667 = vmax.f32 %v1663, 0.0
    %v1668 = vmax.f32 %v1664, 0.0
    %v1669 = vmax.f32 %v1665, 0.0
    %v1670 = vlog2.pop %v1666
    %v1671 = vmul.f32 %v1670, 0.6931472
    %v1672 = vlog2.pop %v1667
    %v1673 = vmul.f32 %v1672, 0.6931472
    %v1674 = vlog2.pop %v1668
    %v1675 = vmul.f32 %v1674, 0.6931472
    %v1676 = vlog2.pop %v1669
    %v1677 = vmul.f32 %v1676, 0.6931472
    %v1678 = vmul.f32 %v1671, 0.032258064
    %v1679 = vmul.f32 %v1673, 0.032258064
    %v1680 = vmul.f32 %v1675, 0.032258064
    %v1681 = vmul.f32 %v1677, 0.032258064
    %v1682 = vmul.f32 %v1678, 1.442695
    %v1683 = vpow.pop %v1682
    %v1684 = vmul.f32 %v1679, 1.442695
    %v1685 = vpow.pop %v1684
    %v1686 = vmul.f32 %v1680, 1.442695
    %v1687 = vpow.pop %v1686
    %v1688 = vmul.f32 %v1681, 1.442695
    %v1689 = vpow.pop %v1688
    %v1690 = vadd.f32 %v1683, %v1685
    %v1691 = vadd.f32 %v1690, %v1687
    %v1692 = vadd.f32 %v1691, %v1689
    %v1693 = vrot.slane %v1692, 4
    %v1694 = vadd.f32 %v1692, %v1693
    %v1695 = vrot.slane %v1694, 2
    %v1696 = vadd.f32 %v1694, %v1695
    %v1697 = vrot.slane %v1696, 1
    %v1698 = vadd.f32 %v1696, %v1697
    %v1699 = vsub.f32 %v1698, 1.0
    %vm1700 = vcmp.ge.f32.partialorder %v1699, 0.0
    %v1701 = vsel %vm1700, %v1661, %v1659
    %v1702 = vmul.f32 %v1660, 0.5
    %v1703 = vadd.f32 %v1701, %v1702
    %v1704 = vsub.f32 %v871, %v1703
    %v1705 = vsub.f32 %v877, %v1703
    %v1706 = vsub.f32 %v883, %v1703
    %v1707 = vsub.f32 %v889, %v1703
    %v1708 = vmax.f32 %v1704, 0.0
    %v1709 = vmax.f32 %v1705, 0.0
    %v1710 = vmax.f32 %v1706, 0.0
    %v1711 = vmax.f32 %v1707, 0.0
    %v1712 = vlog2.pop %v1708
    %v1713 = vmul.f32 %v1712, 0.6931472
    %v1714 = vlog2.pop %v1709
    %v1715 = vmul.f32 %v1714, 0.6931472
    %v1716 = vlog2.pop %v1710
    %v1717 = vmul.f32 %v1716, 0.6931472
    %v1718 = vlog2.pop %v1711
    %v1719 = vmul.f32 %v1718, 0.6931472
    %v1720 = vmul.f32 %v1713, 0.032258064
    %v1721 = vmul.f32 %v1715, 0.032258064
    %v1722 = vmul.f32 %v1717, 0.032258064
    %v1723 = vmul.f32 %v1719, 0.032258064
    %v1724 = vmul.f32 %v1720, 1.442695
    %v1725 = vpow.pop %v1724
    %v1726 = vmul.f32 %v1721, 1.442695
    %v1727 = vpow.pop %v1726
    %v1728 = vmul.f32 %v1722, 1.442695
    %v1729 = vpow.pop %v1728
    %v1730 = vmul.f32 %v1723, 1.442695
    %v1731 = vpow.pop %v1730
    %v1732 = vadd.f32 %v1725, %v1727
    %v1733 = vadd.f32 %v1732, %v1729
    %v1734 = vadd.f32 %v1733, %v1731
    %v1735 = vrot.slane %v1734, 4
    %v1736 = vadd.f32 %v1734, %v1735
    %v1737 = vrot.slane %v1736, 2
    %v1738 = vadd.f32 %v1736, %v1737
    %v1739 = vrot.slane %v1738, 1
    %v1740 = vadd.f32 %v1738, %v1739
    %v1741 = vsub.f32 %v1740, 1.0
    %vm1742 = vcmp.ge.f32.partialorder %v1741, 0.0
    %v1743 = vsel %vm1742, %v1703, %v1701
    %v1744 = vmul.f32 %v1702, 0.5
    %v1745 = vadd.f32 %v1743, %v1744
    %v1746 = vsub.f32 %v871, %v1745
    %v1747 = vsub.f32 %v877, %v1745
    %v1748 = vsub.f32 %v883, %v1745
    %v1749 = vsub.f32 %v889, %v1745
    %v1750 = vmax.f32 %v1746, 0.0
    %v1751 = vmax.f32 %v1747, 0.0
    %v1752 = vmax.f32 %v1748, 0.0
    %v1753 = vmax.f32 %v1749, 0.0
    %v1754 = vlog2.pop %v1750
    %v1755 = vmul.f32 %v1754, 0.6931472
    %v1756 = vlog2.pop %v1751
    %v1757 = vmul.f32 %v1756, 0.6931472
    %v1758 = vlog2.pop %v1752
    %v1759 = vmul.f32 %v1758, 0.6931472
    %v1760 = vlog2.pop %v1753
    %v1761 = vmul.f32 %v1760, 0.6931472
    %v1762 = vmul.f32 %v1755, 0.032258064
    %v1763 = vmul.f32 %v1757, 0.032258064
    %v1764 = vmul.f32 %v1759, 0.032258064
    %v1765 = vmul.f32 %v1761, 0.032258064
    %v1766 = vmul.f32 %v1762, 1.442695
    %v1767 = vpow.pop %v1766
    %v1768 = vmul.f32 %v1763, 1.442695
    %v1769 = vpow.pop %v1768
    %v1770 = vmul.f32 %v1764, 1.442695
    %v1771 = vpow.pop %v1770
    %v1772 = vmul.f32 %v1765, 1.442695
    %v1773 = vpow.pop %v1772
    %v1774 = vadd.f32 %v1767, %v1769
    %v1775 = vadd.f32 %v1774, %v1771
    %v1776 = vadd.f32 %v1775, %v1773
    %v1777 = vrot.slane %v1776, 4
    %v1778 = vadd.f32 %v1776, %v1777
    %v1779 = vrot.slane %v1778, 2
    %v1780 = vadd.f32 %v1778, %v1779
    %v1781 = vrot.slane %v1780, 1
    %v1782 = vadd.f32 %v1780, %v1781
    %v1783 = vsub.f32 %v1782, 1.0
    %vm1784 = vcmp.ge.f32.partialorder %v1783, 0.0
    %v1785 = vsel %vm1784, %v1745, %v1743
    %v1786 = vmul.f32 %v1744, 0.5
    %v1787 = vadd.f32 %v1785, %v1786
    %v1788 = vsub.f32 %v871, %v1787
    %v1789 = vsub.f32 %v877, %v1787
    %v1790 = vsub.f32 %v883, %v1787
    %v1791 = vsub.f32 %v889, %v1787
    %v1792 = vmax.f32 %v1788, 0.0
    %v1793 = vmax.f32 %v1789, 0.0
    %v1794 = vmax.f32 %v1790, 0.0
    %v1795 = vmax.f32 %v1791, 0.0
    %v1796 = vlog2.pop %v1792
    %v1797 = vmul.f32 %v1796, 0.6931472
    %v1798 = vlog2.pop %v1793
    %v1799 = vmul.f32 %v1798, 0.6931472
    %v1800 = vlog2.pop %v1794
    %v1801 = vmul.f32 %v1800, 0.6931472
    %v1802 = vlog2.pop %v1795
    %v1803 = vmul.f32 %v1802, 0.6931472
    %v1804 = vmul.f32 %v1797, 0.032258064
    %v1805 = vmul.f32 %v1799, 0.032258064
    %v1806 = vmul.f32 %v1801, 0.032258064
    %v1807 = vmul.f32 %v1803, 0.032258064
    %v1808 = vmul.f32 %v1804, 1.442695
    %v1809 = vpow.pop %v1808
    %v1810 = vmul.f32 %v1805, 1.442695
    %v1811 = vpow.pop %v1810
    %v1812 = vmul.f32 %v1806, 1.442695
    %v1813 = vpow.pop %v1812
    %v1814 = vmul.f32 %v1807, 1.442695
    %v1815 = vpow.pop %v1814
    %v1816 = vadd.f32 %v1809, %v1811
    %v1817 = vadd.f32 %v1816, %v1813
    %v1818 = vadd.f32 %v1817, %v1815
    %v1819 = vrot.slane %v1818, 4
    %v1820 = vadd.f32 %v1818, %v1819
    %v1821 = vrot.slane %v1820, 2
    %v1822 = vadd.f32 %v1820, %v1821
    %v1823 = vrot.slane %v1822, 1
    %v1824 = vadd.f32 %v1822, %v1823
    %v1825 = vsub.f32 %v1824, 1.0
    %vm1826 = vcmp.ge.f32.partialorder %v1825, 0.0
    %v1827 = vsel %vm1826, %v1787, %v1785
    %v1828 = vmul.f32 %v1786, 0.5
    %v1829 = vadd.f32 %v1827, %v1828
    %v1830 = vsub.f32 %v871, %v1829
    %v1831 = vsub.f32 %v877, %v1829
    %v1832 = vsub.f32 %v883, %v1829
    %v1833 = vsub.f32 %v889, %v1829
    %v1834 = vmax.f32 %v1830, 0.0
    %v1835 = vmax.f32 %v1831, 0.0
    %v1836 = vmax.f32 %v1832, 0.0
    %v1837 = vmax.f32 %v1833, 0.0
    %v1838 = vlog2.pop %v1834
    %v1839 = vmul.f32 %v1838, 0.6931472
    %v1840 = vlog2.pop %v1835
    %v1841 = vmul.f32 %v1840, 0.6931472
    %v1842 = vlog2.pop %v1836
    %v1843 = vmul.f32 %v1842, 0.6931472
    %v1844 = vlog2.pop %v1837
    %v1845 = vmul.f32 %v1844, 0.6931472
    %v1846 = vmul.f32 %v1839, 0.032258064
    %v1847 = vmul.f32 %v1841, 0.032258064
    %v1848 = vmul.f32 %v1843, 0.032258064
    %v1849 = vmul.f32 %v1845, 0.032258064
    %v1850 = vmul.f32 %v1846, 1.442695
    %v1851 = vpow.pop %v1850
    %v1852 = vmul.f32 %v1847, 1.442695
    %v1853 = vpow.pop %v1852
    %v1854 = vmul.f32 %v1848, 1.442695
    %v1855 = vpow.pop %v1854
    %v1856 = vmul.f32 %v1849, 1.442695
    %v1857 = vpow.pop %v1856
    %v1858 = vadd.f32 %v1851, %v1853
    %v1859 = vadd.f32 %v1858, %v1855
    %v1860 = vadd.f32 %v1859, %v1857
    %v1861 = vrot.slane %v1860, 4
    %v1862 = vadd.f32 %v1860, %v1861
    %v1863 = vrot.slane %v1862, 2
    %v1864 = vadd.f32 %v1862, %v1863
    %v1865 = vrot.slane %v1864, 1
    %v1866 = vadd.f32 %v1864, %v1865
    %v1867 = vsub.f32 %v1866, 1.0
    %vm1868 = vcmp.ge.f32.partialorder %v1867, 0.0
    %v1869 = vsel %vm1868, %v1829, %v1827
    %v1870 = vmul.f32 %v1828, 0.5
    %v1871 = vadd.f32 %v1869, %v1870
    %v1872 = vsub.f32 %v871, %v1871
    %v1873 = vsub.f32 %v877, %v1871
    %v1874 = vsub.f32 %v883, %v1871
    %v1875 = vsub.f32 %v889, %v1871
    %v1876 = vmax.f32 %v1872, 0.0
    %v1877 = vmax.f32 %v1873, 0.0
    %v1878 = vmax.f32 %v1874, 0.0
    %v1879 = vmax.f32 %v1875, 0.0
    %v1880 = vlog2.pop %v1876
    %v1881 = vmul.f32 %v1880, 0.6931472
    %v1882 = vlog2.pop %v1877
    %v1883 = vmul.f32 %v1882, 0.6931472
    %v1884 = vlog2.pop %v1878
    %v1885 = vmul.f32 %v1884, 0.6931472
    %v1886 = vlog2.pop %v1879
    %v1887 = vmul.f32 %v1886, 0.6931472
    %v1888 = vmul.f32 %v1881, 0.032258064
    %v1889 = vmul.f32 %v1883, 0.032258064
    %v1890 = vmul.f32 %v1885, 0.032258064
    %v1891 = vmul.f32 %v1887, 0.032258064
    %v1892 = vmul.f32 %v1888, 1.442695
    %v1893 = vpow.pop %v1892
    %v1894 = vmul.f32 %v1889, 1.442695
    %v1895 = vpow.pop %v1894
    %v1896 = vmul.f32 %v1890, 1.442695
    %v1897 = vpow.pop %v1896
    %v1898 = vmul.f32 %v1891, 1.442695
    %v1899 = vpow.pop %v1898
    %v1900 = vadd.f32 %v1893, %v1895
    %v1901 = vadd.f32 %v1900, %v1897
    %v1902 = vadd.f32 %v1901, %v1899
    %v1903 = vrot.slane %v1902, 4
    %v1904 = vadd.f32 %v1902, %v1903
    %v1905 = vrot.slane %v1904, 2
    %v1906 = vadd.f32 %v1904, %v1905
    %v1907 = vrot.slane %v1906, 1
    %v1908 = vadd.f32 %v1906, %v1907
    %v1909 = vsub.f32 %v1908, 1.0
    %vm1910 = vcmp.ge.f32.partialorder %v1909, 0.0
    %v1911 = vsel %vm1910, %v1871, %v1869
    %v1912 = vmul.f32 %v1870, 0.5
    %v1913 = vadd.f32 %v1911, %v1912
    %v1914 = vsub.f32 %v871, %v1913
    %v1915 = vsub.f32 %v877, %v1913
    %v1916 = vsub.f32 %v883, %v1913
    %v1917 = vsub.f32 %v889, %v1913
    %v1918 = vmax.f32 %v1914, 0.0
    %v1919 = vmax.f32 %v1915, 0.0
    %v1920 = vmax.f32 %v1916, 0.0
    %v1921 = vmax.f32 %v1917, 0.0
    %v1922 = vlog2.pop %v1918
    %v1923 = vmul.f32 %v1922, 0.6931472
    %v1924 = vlog2.pop %v1919
    %v1925 = vmul.f32 %v1924, 0.6931472
    %v1926 = vlog2.pop %v1920
    %v1927 = vmul.f32 %v1926, 0.6931472
    %v1928 = vlog2.pop %v1921
    %v1929 = vmul.f32 %v1928, 0.6931472
    %v1930 = vmul.f32 %v1923, 0.032258064
    %v1931 = vmul.f32 %v1925, 0.032258064
    %v1932 = vmul.f32 %v1927, 0.032258064
    %v1933 = vmul.f32 %v1929, 0.032258064
    %v1934 = vmul.f32 %v1930, 1.442695
    %v1935 = vpow.pop %v1934
    %v1936 = vmul.f32 %v1931, 1.442695
    %v1937 = vpow.pop %v1936
    %v1938 = vmul.f32 %v1932, 1.442695
    %v1939 = vpow.pop %v1938
    %v1940 = vmul.f32 %v1933, 1.442695
    %v1941 = vpow.pop %v1940
    %v1942 = vadd.f32 %v1935, %v1937
    %v1943 = vadd.f32 %v1942, %v1939
    %v1944 = vadd.f32 %v1943, %v1941
    %v1945 = vrot.slane %v1944, 4
    %v1946 = vadd.f32 %v1944, %v1945
    %v1947 = vrot.slane %v1946, 2
    %v1948 = vadd.f32 %v1946, %v1947
    %v1949 = vrot.slane %v1948, 1
    %v1950 = vadd.f32 %v1948, %v1949
    %v1951 = vsub.f32 %v1950, 1.0
    %vm1952 = vcmp.ge.f32.partialorder %v1951, 0.0
    %v1953 = vsel %vm1952, %v1913, %v1911
    %v1954 = vmul.f32 %v1912, 0.5
    %v1955 = vadd.f32 %v1953, %v1954
    %v1956 = vsub.f32 %v871, %v1955
    %v1957 = vsub.f32 %v877, %v1955
    %v1958 = vsub.f32 %v883, %v1955
    %v1959 = vsub.f32 %v889, %v1955
    %v1960 = vmax.f32 %v1956, 0.0
    %v1961 = vmax.f32 %v1957, 0.0
    %v1962 = vmax.f32 %v1958, 0.0
    %v1963 = vmax.f32 %v1959, 0.0
    %v1964 = vlog2.pop %v1960
    %v1965 = vmul.f32 %v1964, 0.6931472
    %v1966 = vlog2.pop %v1961
    %v1967 = vmul.f32 %v1966, 0.6931472
    %v1968 = vlog2.pop %v1962
    %v1969 = vmul.f32 %v1968, 0.6931472
    %v1970 = vlog2.pop %v1963
    %v1971 = vmul.f32 %v1970, 0.6931472
    %v1972 = vmul.f32 %v1965, 0.032258064
    %v1973 = vmul.f32 %v1967, 0.032258064
    %v1974 = vmul.f32 %v1969, 0.032258064
    %v1975 = vmul.f32 %v1971, 0.032258064
    %v1976 = vmul.f32 %v1972, 1.442695
    %v1977 = vpow.pop %v1976
    %v1978 = vmul.f32 %v1973, 1.442695
    %v1979 = vpow.pop %v1978
    %v1980 = vmul.f32 %v1974, 1.442695
    %v1981 = vpow.pop %v1980
    %v1982 = vmul.f32 %v1975, 1.442695
    %v1983 = vpow.pop %v1982
    %v1984 = vadd.f32 %v1977, %v1979
    %v1985 = vadd.f32 %v1984, %v1981
    %v1986 = vadd.f32 %v1985, %v1983
    %v1987 = vrot.slane %v1986, 4
    %v1988 = vadd.f32 %v1986, %v1987
    %v1989 = vrot.slane %v1988, 2
    %v1990 = vadd.f32 %v1988, %v1989
    %v1991 = vrot.slane %v1990, 1
    %v1992 = vadd.f32 %v1990, %v1991
    %v1993 = vsub.f32 %v1992, 1.0
    %vm1994 = vcmp.ge.f32.partialorder %v1993, 0.0
    %v1995 = vsel %vm1994, %v1955, %v1953
    %v1996 = vmul.f32 %v1954, 0.5
    %v1997 = vadd.f32 %v1995, %v1996
    %v1998 = vsub.f32 %v871, %v1997
    %v1999 = vsub.f32 %v877, %v1997
    %v2000 = vsub.f32 %v883, %v1997
    %v2001 = vsub.f32 %v889, %v1997
    %v2002 = vmax.f32 %v1998, 0.0
    %v2003 = vmax.f32 %v1999, 0.0
    %v2004 = vmax.f32 %v2000, 0.0
    %v2005 = vmax.f32 %v2001, 0.0
    %v2006 = vlog2.pop %v2002
    %v2007 = vmul.f32 %v2006, 0.6931472
    %v2008 = vlog2.pop %v2003
    %v2009 = vmul.f32 %v2008, 0.6931472
    %v2010 = vlog2.pop %v2004
    %v2011 = vmul.f32 %v2010, 0.6931472
    %v2012 = vlog2.pop %v2005
    %v2013 = vmul.f32 %v2012, 0.6931472
    %v2014 = vmul.f32 %v2007, 0.032258064
    %v2015 = vmul.f32 %v2009, 0.032258064
    %v2016 = vmul.f32 %v2011, 0.032258064
    %v2017 = vmul.f32 %v2013, 0.032258064
    %v2018 = vmul.f32 %v2014, 1.442695
    %v2019 = vpow.pop %v2018
    %v2020 = vmul.f32 %v2015, 1.442695
    %v2021 = vpow.pop %v2020
    %v2022 = vmul.f32 %v2016, 1.442695
    %v2023 = vpow.pop %v2022
    %v2024 = vmul.f32 %v2017, 1.442695
    %v2025 = vpow.pop %v2024
    %v2026 = vadd.f32 %v2019, %v2021
    %v2027 = vadd.f32 %v2026, %v2023
    %v2028 = vadd.f32 %v2027, %v2025
    %v2029 = vrot.slane %v2028, 4
    %v2030 = vadd.f32 %v2028, %v2029
    %v2031 = vrot.slane %v2030, 2
    %v2032 = vadd.f32 %v2030, %v2031
    %v2033 = vrot.slane %v2032, 1
    %v2034 = vadd.f32 %v2032, %v2033
    %v2035 = vsub.f32 %v2034, 1.0
    %vm2036 = vcmp.ge.f32.partialorder %v2035, 0.0
    %v2037 = vsel %vm2036, %v1997, %v1995
    %v2038 = vmul.f32 %v1996, 0.5
    %v2039 = vadd.f32 %v2037, %v2038
    %v2040 = vsub.f32 %v871, %v2039
    %v2041 = vsub.f32 %v877, %v2039
    %v2042 = vsub.f32 %v883, %v2039
    %v2043 = vsub.f32 %v889, %v2039
    %v2044 = vmax.f32 %v2040, 0.0
    %v2045 = vmax.f32 %v2041, 0.0
    %v2046 = vmax.f32 %v2042, 0.0
    %v2047 = vmax.f32 %v2043, 0.0
    %v2048 = vlog2.pop %v2044
    %v2049 = vmul.f32 %v2048, 0.6931472
    %v2050 = vlog2.pop %v2045
    %v2051 = vmul.f32 %v2050, 0.6931472
    %v2052 = vlog2.pop %v2046
    %v2053 = vmul.f32 %v2052, 0.6931472
    %v2054 = vlog2.pop %v2047
    %v2055 = vmul.f32 %v2054, 0.6931472
    %v2056 = vmul.f32 %v2049, 0.032258064
    %v2057 = vmul.f32 %v2051, 0.032258064
    %v2058 = vmul.f32 %v2053, 0.032258064
    %v2059 = vmul.f32 %v2055, 0.032258064
    %v2060 = vmul.f32 %v2056, 1.442695
    %v2061 = vpow.pop %v2060
    %v2062 = vmul.f32 %v2057, 1.442695
    %v2063 = vpow.pop %v2062
    %v2064 = vmul.f32 %v2058, 1.442695
    %v2065 = vpow.pop %v2064
    %v2066 = vmul.f32 %v2059, 1.442695
    %v2067 = vpow.pop %v2066
    %v2068 = vadd.f32 %v2061, %v2063
    %v2069 = vadd.f32 %v2068, %v2065
    %v2070 = vadd.f32 %v2069, %v2067
    %v2071 = vrot.slane %v2070, 4
    %v2072 = vadd.f32 %v2070, %v2071
    %v2073 = vrot.slane %v2072, 2
    %v2074 = vadd.f32 %v2072, %v2073
    %v2075 = vrot.slane %v2074, 1
    %v2076 = vadd.f32 %v2074, %v2075
    %v2077 = vsub.f32 %v2076, 1.0
    %vm2078 = vcmp.ge.f32.partialorder %v2077, 0.0
    %v2079 = vsel %vm2078, %v2039, %v2037
    %v2080 = vmul.f32 %v2038, 0.5
    %v2081 = vadd.f32 %v2079, %v2080
    %v2082 = vsub.f32 %v871, %v2081
    %v2083 = vsub.f32 %v877, %v2081
    %v2084 = vsub.f32 %v883, %v2081
    %v2085 = vsub.f32 %v889, %v2081
    %v2086 = vmax.f32 %v2082, 0.0
    %v2087 = vmax.f32 %v2083, 0.0
    %v2088 = vmax.f32 %v2084, 0.0
    %v2089 = vmax.f32 %v2085, 0.0
    %v2090 = vlog2.pop %v2086
    %v2091 = vmul.f32 %v2090, 0.6931472
    %v2092 = vlog2.pop %v2087
    %v2093 = vmul.f32 %v2092, 0.6931472
    %v2094 = vlog2.pop %v2088
    %v2095 = vmul.f32 %v2094, 0.6931472
    %v2096 = vlog2.pop %v2089
    %v2097 = vmul.f32 %v2096, 0.6931472
    %v2098 = vmul.f32 %v2091, 0.032258064
    %v2099 = vmul.f32 %v2093, 0.032258064
    %v2100 = vmul.f32 %v2095, 0.032258064
    %v2101 = vmul.f32 %v2097, 0.032258064
    %v2102 = vmul.f32 %v2098, 1.442695
    %v2103 = vpow.pop %v2102
    %v2104 = vmul.f32 %v2099, 1.442695
    %v2105 = vpow.pop %v2104
    %v2106 = vmul.f32 %v2100, 1.442695
    %v2107 = vpow.pop %v2106
    %v2108 = vmul.f32 %v2101, 1.442695
    %v2109 = vpow.pop %v2108
    %v2110 = vadd.f32 %v2103, %v2105
    %v2111 = vadd.f32 %v2110, %v2107
    %v2112 = vadd.f32 %v2111, %v2109
    %v2113 = vrot.slane %v2112, 4
    %v2114 = vadd.f32 %v2112, %v2113
    %v2115 = vrot.slane %v2114, 2
    %v2116 = vadd.f32 %v2114, %v2115
    %v2117 = vrot.slane %v2116, 1
    %v2118 = vadd.f32 %v2116, %v2117
    %v2119 = vsub.f32 %v2118, 1.0
    %vm2120 = vcmp.ge.f32.partialorder %v2119, 0.0
    %v2121 = vsel %vm2120, %v2081, %v2079
    %v2122 = vmul.f32 %v2080, 0.5
    %v2123 = vadd.f32 %v2121, %v2122
    %v2124 = vsub.f32 %v871, %v2123
    %v2125 = vsub.f32 %v877, %v2123
    %v2126 = vsub.f32 %v883, %v2123
    %v2127 = vsub.f32 %v889, %v2123
    %v2128 = vmax.f32 %v2124, 0.0
    %v2129 = vmax.f32 %v2125, 0.0
    %v2130 = vmax.f32 %v2126, 0.0
    %v2131 = vmax.f32 %v2127, 0.0
    %v2132 = vlog2.pop %v2128
    %v2133 = vmul.f32 %v2132, 0.6931472
    %v2134 = vlog2.pop %v2129
    %v2135 = vmul.f32 %v2134, 0.6931472
    %v2136 = vlog2.pop %v2130
    %v2137 = vmul.f32 %v2136, 0.6931472
    %v2138 = vlog2.pop %v2131
    %v2139 = vmul.f32 %v2138, 0.6931472
    %v2140 = vmul.f32 %v2133, 0.032258064
    %v2141 = vmul.f32 %v2135, 0.032258064
    %v2142 = vmul.f32 %v2137, 0.032258064
    %v2143 = vmul.f32 %v2139, 0.032258064
    %v2144 = vmul.f32 %v2140, 1.442695
    %v2145 = vpow.pop %v2144
    %v2146 = vmul.f32 %v2141, 1.442695
    %v2147 = vpow.pop %v2146
    %v2148 = vmul.f32 %v2142, 1.442695
    %v2149 = vpow.pop %v2148
    %v2150 = vmul.f32 %v2143, 1.442695
    %v2151 = vpow.pop %v2150
    %v2152 = vadd.f32 %v2145, %v2147
    %v2153 = vadd.f32 %v2152, %v2149
    %v2154 = vadd.f32 %v2153, %v2151
    %v2155 = vrot.slane %v2154, 4
    %v2156 = vadd.f32 %v2154, %v2155
    %v2157 = vrot.slane %v2156, 2
    %v2158 = vadd.f32 %v2156, %v2157
    %v2159 = vrot.slane %v2158, 1
    %v2160 = vadd.f32 %v2158, %v2159
    %v2161 = vmul.f32 %v2145, %v2145
    %v2162 = vmul.f32 %v2147, %v2147
    %v2163 = vmul.f32 %v2149, %v2149
    %v2164 = vmul.f32 %v2151, %v2151
    %v2165 = vadd.f32 %v2161, %v2162
    %v2166 = vadd.f32 %v2165, %v2163
    %v2167 = vadd.f32 %v2166, %v2164
    %v2168 = vrot.slane %v2167, 4
    %v2169 = vadd.f32 %v2167, %v2168
    %v2170 = vrot.slane %v2169, 2
    %v2171 = vadd.f32 %v2169, %v2170
    %v2172 = vrot.slane %v2171, 1
    %v2173 = vadd.f32 %v2171, %v2172
    %v2174 = vmul.f32 %v2145, %v871
    %v2175 = vmul.f32 %v2147, %v877
    %v2176 = vmul.f32 %v2149, %v883
    %v2177 = vmul.f32 %v2151, %v889
    %v2178 = vadd.f32 %v2174, %v2175
    %v2179 = vadd.f32 %v2178, %v2176
    %v2180 = vadd.f32 %v2179, %v2177
    %v2181 = vrot.slane %v2180, 4
    %v2182 = vadd.f32 %v2180, %v2181
    %v2183 = vrot.slane %v2182, 2
    %v2184 = vadd.f32 %v2182, %v2183
    %v2185 = vrot.slane %v2184, 1
    %v2186 = vadd.f32 %v2184, %v2185
    %v2187 = vrcp.pop %v2160
    %v2188 = vmul.f32 %v2160, %v2187
    %v2189 = vsub.f32 2.0, %v2188
    %v2190 = vmul.f32 %v2187, %v2189
    %v2191 = vmul.f32 %v2173, %v2190
    %v2192 = vmul.f32 %v2191, %v2190
    %v2193 = vsub.f32 1.0, %v2192
    %v2194 = vmul.f32 %v2193, 0.5
    %v2195 = vld [vmem:[%s1] sm:$0x1]
    %v2196 = vlaneseq
    %v2197 = vshrl.u32 %v2196, 7
    %v2198 = vsub.s32 0, %v2197
    %v2199 = vrot.slane %v2195, %v2198
    %vm2200 = vcmp.eq.s32.totalorder %v27, %v2199
    %vm2201 = vcmp.eq.s32.totalorder %v28, %v2199
    %vm2202 = vcmp.eq.s32.totalorder %v29, %v2199
    %vm2203 = vcmp.eq.s32.totalorder %v30, %v2199
    %v2204 = vsel %vm2200, %v871, 0.0
    %v2205 = vsel %vm2201, %v877, 0.0
    %v2206 = vsel %vm2202, %v883, 0.0
    %v2207 = vsel %vm2203, %v889, 0.0
    %v2208 = vadd.f32 %v2204, %v2205
    %v2209 = vadd.f32 %v2208, %v2206
    %v2210 = vadd.f32 %v2209, %v2207
    %v2211 = vrot.slane %v2210, 4
    %v2212 = vadd.f32 %v2210, %v2211
    %v2213 = vrot.slane %v2212, 2
    %v2214 = vadd.f32 %v2212, %v2213
    %v2215 = vrot.slane %v2214, 1
    %v2216 = vadd.f32 %v2214, %v2215
    %v2217 = vmul.f32 %v2186, %v2190
    %v2218 = vadd.f32 %v2194, %v2217
    %v2219 = vsub.f32 %v2218, %v2216
    %2220 = vst [vmem:[#allocation6] sm:$0x1] %v2219
    // Predicated region
    $region14: #{tpu_custom_call.1} parent=1 // pred_check
      _
    $region15: #{tpu_custom_call.1} parent=1 // pred_check_branch
      %2222 = sbr.rel (0) target = $region17
    $region16: #{tpu_custom_call.1} parent=1 // pred_region
      %s2224 = ssub.s32 16, 16
      %2225 = vsyncadd [#allocation5], %s2224
      %s2227 = sshll.u32 [#allocation6], 4
      %s2228 = int_to_ptr.vmem [resolvable:$true] %s2227
      %2230 = dma.vmem_to_hbm [thread:$0]  %s2228, 16, %s2, [#allocation5]
    $region17: #{tpu_custom_call.1} parent=1 // pred_fallthru
      _
    // Predicated region
    $region18: #{tpu_custom_call.1} parent=1 // pred_check
      _
    $region19: #{tpu_custom_call.1} parent=1 // pred_check_branch
      %2232 = sbr.rel (0) target = $region21
    $region20: #{tpu_custom_call.1} parent=1 // pred_region
      %2233 = dma.done [#allocation5], 16
    $region21: #{tpu_custom_call.1} parent=1 // pred_fallthru
      _
    %2234 = vsyncpa [#allocation4], 1
    %2235 = vsyncpa [#allocation5], 1

</llo_original>
